<compile_context>
chip_gen: v7x
topology: tpu7x:2x2x1
jax: 0.10.0
libtpu: 0.0.40
codegen_flags: <defaults>
</compile_context>

<pallas_src>
import math
from functools import partial

import jax
import jax.numpy as jnp
from jax.experimental import pallas as pl
from jax.experimental.pallas import tpu as pltpu


# --------------------------------------------------------------------------- #
# Helpers
# --------------------------------------------------------------------------- #
def _pick_tile(total, target, mult=8):
    """Largest t <= target with total % t == 0 and (t % mult == 0 or t == total)."""
    target = max(1, min(target, total))
    for t in range(target, 0, -1):
        if total % t == 0 and (t % mult == 0 or t == total):
            return t
    return total


# --------------------------------------------------------------------------- #
# Kernels
# --------------------------------------------------------------------------- #
def _norm_proj_kernel(x_ref, gamma_ref, *w_and_out_refs, scale):
    """ChannelRMSNorm (L2-normalize over channels * sqrt(C) * gamma) followed by
    one matmul (== 1x1 conv) per weight.  Refs: (w_0..w_{p-1}, out_0..out_{p-1})."""
    n = len(w_and_out_refs) // 2
    w_refs, out_refs = w_and_out_refs[:n], w_and_out_refs[n:]
    x = x_ref[0]                                                   # (tn, C)
    l2 = jnp.sqrt(jnp.sum(x * x, axis=-1, keepdims=True))
    normed = (x / jnp.maximum(l2, 1e-12)) * scale * gamma_ref[...]
    for w_ref, out_ref in zip(w_refs, out_refs):
        out_ref[0] = jnp.dot(normed, w_ref[...],
                             preferred_element_type=jnp.float32)


def _attn_out_kernel(q_ref, k_ref, v_ref, nk_ref, nv_ref, wo_ref, o_ref, *,
                     heads, dim_head, scale, dot_product):
    """One (batch, query-tile) grid step: all heads' attention (with the learned
    null key/value handled without concatenation) + fused to_out projection."""
    D = dim_head
    q = q_ref[0]                     # (TQ, Di)
    k = k_ref[0]                     # (N,  Di)   (== q projection when to_k is None)
    v = v_ref[0]                     # (N,  Di)

    # Fold the softmax scale (and the factor 2 of the L2 form) into q once.
    q_eff = q * (scale if dot_product else 2.0 * scale)

    head_outs = []
    for h in range(heads):           # heads is a small static int
        sl = slice(h * D, (h + 1) * D)
        qh, kh, vh = q_eff[:, sl], k[:, sl], v[:, sl]
        nk = nk_ref[h:h + 1, :]      # (1, D) null key for this head (static slice)
        nv = nv_ref[h:h + 1, :]      # (1, D) null value

        dots = jnp.einsum("qd,kd->qk", qh, kh,
                          preferred_element_type=jnp.float32)       # (TQ, N)
        ndots = jnp.einsum("qd,kd->qk", qh, nk,
                           preferred_element_type=jnp.float32)      # (TQ, 1)

        if dot_product:
            sim_main, sim_null = dots, ndots
        else:
            # sim = -(|q|^2 + |k|^2 - 2 q.k) * scale ; the per-query -scale*|q|^2
            # term is constant along the softmax axis and is dropped.
            k_sq = jnp.sum(kh * kh, axis=-1)[None, :]               # (1, N)
            nk_sq = jnp.sum(nk * nk, axis=-1, keepdims=True)        # (1, 1)
            sim_main = dots - scale * k_sq
            sim_null = ndots - scale * nk_sq

        # softmax over the (null ++ main) key axis
        m = jnp.maximum(jnp.max(sim_main, axis=-1, keepdims=True), sim_null)
        p_main = jnp.exp(sim_main - m)
        p_null = jnp.exp(sim_null - m)
        denom = jnp.sum(p_main, axis=-1, keepdims=True) + p_null

        out_h = (jnp.dot(p_main, vh, preferred_element_type=jnp.float32)
                 + p_null * nv) * pl.reciprocal(denom, approx=True)  # (TQ, D)
        head_outs.append(out_h)

    attn_out = jnp.concatenate(head_outs, axis=-1)                   # (TQ, Di)
    # Fused to_out projection -> lane-dense (TQ, C) store.
    o_ref[0] = jnp.dot(attn_out, wo_ref[...],
                       preferred_element_type=jnp.float32)


# --------------------------------------------------------------------------- #
# Wrapper
# --------------------------------------------------------------------------- #
def self_attention(x_nchw, params, *, heads, dim_head, dot_product=True,
                   row_tile=512, q_tile=256):
    B, C, H, W = x_nchw.shape
    N = H * W
    D = dim_head
    Di = heads * D
    f32 = jnp.float32
    VMEM_LIMIT = 64 * 1024 * 1024

    # Single boundary conversion NCHW -> (B, N, C) channels-last.
    x_cl = jnp.transpose(x_nchw, (0, 2, 3, 1)).reshape(B, N, C)

    tn = _pick_tile(N, row_tile)
    tq = _pick_tile(N, q_tile)

    weights = [params["wq"]]
    if dot_product:
        weights.append(params["wk"])
    weights.append(params["wv"])
    n_proj = len(weights)

    # --- ChannelRMSNorm + q/(k)/v projections, row-tiled & pipelined ---------
    proj_out = pl.pallas_call(
        partial(_norm_proj_kernel, scale=math.sqrt(C)),
        grid=(B, N // tn),
        in_specs=[pl.BlockSpec((1, tn, C), lambda b, i: (b, i, 0)),
                  pl.BlockSpec((1, C), lambda b, i: (0, 0))]
                 + [pl.BlockSpec((C, Di), lambda b, i: (0, 0))] * n_proj,
        out_specs=[pl.BlockSpec((1, tn, Di), lambda b, i: (b, i, 0))] * n_proj,
        out_shape=[jax.ShapeDtypeStruct((B, N, Di), f32)] * n_proj,
        compiler_params=pltpu.CompilerParams(
            dimension_semantics=("parallel", "parallel"),
            vmem_limit_bytes=VMEM_LIMIT),
    )(x_cl, params["gamma"], *weights)

    if dot_product:
        q, k, v = proj_out
    else:
        q, v = proj_out
        k = q                       # to_k is None: keys are the query projection

    # --- query-tiled attention (all heads per step) + fused to_out -----------
    out_cl = pl.pallas_call(
        partial(_attn_out_kernel, heads=heads, dim_head=D,
                scale=D ** -0.5, dot_product=dot_product),
        grid=(B, N // tq),
        in_specs=[
            pl.BlockSpec((1, tq, Di), lambda b, i: (b, i, 0)),   # q tile
            pl.BlockSpec((1, N, Di), lambda b, i: (b, 0, 0)),    # full keys
            pl.BlockSpec((1, N, Di), lambda b, i: (b, 0, 0)),    # full values
            pl.BlockSpec((heads, D), lambda b, i: (0, 0)),       # null_k
            pl.BlockSpec((heads, D), lambda b, i: (0, 0)),       # null_v
            pl.BlockSpec((Di, C), lambda b, i: (0, 0)),          # wo (to_out)
        ],
        out_specs=pl.BlockSpec((1, tq, C), lambda b, i: (b, i, 0)),
        out_shape=jax.ShapeDtypeStruct((B, N, C), f32),
        compiler_params=pltpu.CompilerParams(
            dimension_semantics=("parallel", "parallel"),
            vmem_limit_bytes=VMEM_LIMIT),
    )(q, k, v, params["null_k"], params["null_v"], params["wo"])

    # channels-last -> NCHW at the boundary.
    return out_cl.reshape(B, H, W, C).transpose(0, 3, 1, 2)


# --------------------------------------------------------------------------- #
# Plain-JAX reference (mirrors the PyTorch forward exactly)
# --------------------------------------------------------------------------- #
def reference(x_nchw, params, *, heads, dim_head, dot_product=True):
    B, C, H, W = x_nchw.shape
    N = H * W
    D = dim_head
    Di = heads * D
    hp = jax.lax.Precision.HIGHEST

    x = jnp.transpose(x_nchw, (0, 2, 3, 1)).reshape(B, N, C)
    l2 = jnp.sqrt(jnp.sum(x * x, axis=-1, keepdims=True))
    normed = x / jnp.maximum(l2, 1e-12) * math.sqrt(C) * params["gamma"]

    q = jnp.einsum("bnc,cd->bnd", normed, params["wq"], precision=hp)
    v = jnp.einsum("bnc,cd->bnd", normed, params["wv"], precision=hp)
    k = (jnp.einsum("bnc,cd->bnd", normed, params["wk"], precision=hp)
         if dot_product else q)

    def split_heads(t):   # b n (h d) -> (b h) n d
        return t.reshape(B, N, heads, D).transpose(0, 2, 1, 3).reshape(B * heads, N, D)

    q, k, v = map(split_heads, (q, k, v))
    nk = jnp.tile(params["null_k"][None], (B, 1, 1)).reshape(B * heads, 1, D)
    nv = jnp.tile(params["null_v"][None], (B, 1, 1)).reshape(B * heads, 1, D)
    k = jnp.concatenate([nk, k], axis=1)
    v = jnp.concatenate([nv, v], axis=1)

    if dot_product:
        sim = jnp.einsum("bid,bjd->bij", q, k, precision=hp)
    else:
        q_sq = jnp.sum(q * q, axis=-1)[:, :, None]
        k_sq = jnp.sum(k * k, axis=-1)[:, None, :]
        sim = -(q_sq + k_sq - 2.0 * jnp.einsum("bid,bjd->bij", q, k, precision=hp))
    sim = sim * (D ** -0.5)
    attn = jax.nn.softmax(sim, axis=-1)
    out = jnp.einsum("bij,bjd->bid", attn, v, precision=hp)
    out = out.reshape(B, heads, N, D).transpose(0, 2, 1, 3).reshape(B, N, Di)
    out = jnp.einsum("bnd,dc->bnc", out, params["wo"], precision=hp)
    return out.reshape(B, H, W, C).transpose(0, 3, 1, 2)


# --------------------------------------------------------------------------- #
# Parameter init (deterministic, synthetic)
# --------------------------------------------------------------------------- #
def init_params(key, dim, heads, dim_head):
    Di = heads * dim_head
    ks = jax.random.split(key, 6)
    std = 0.05
    return {
        "gamma": jnp.ones((1, dim), jnp.float32),                     # ChannelRMSNorm gamma
        "wq": jax.random.normal(ks[0], (dim, Di), jnp.float32) * std,  # to_q (1x1 conv, no bias)
        "wk": jax.random.normal(ks[1], (dim, Di), jnp.float32) * std,  # to_k (used if dot_product)
        "wv": jax.random.normal(ks[2], (dim, Di), jnp.float32) * std,  # to_v
        "null_k": jax.random.normal(ks[3], (heads, dim_head), jnp.float32),
        "null_v": jax.random.normal(ks[4], (heads, dim_head), jnp.float32),
        "wo": jax.random.normal(ks[5], (Di, dim), jnp.float32) * std,  # to_out
    }


if __name__ == "__main__":
    dim, heads, dim_head = 128, 4, 32
    B, H, W = 2, 16, 16

    key = jax.random.PRNGKey(0)
    kx, kp = jax.random.split(key)
    x = jax.random.normal(kx, (B, dim, H, W), jnp.float32)
    params = init_params(kp, dim, heads, dim_head)

    # Exercise both module configurations (dot-product sim and negative-L2 sim).
    for dot_product in (True, False):
        out = self_attention(x, params, heads=heads, dim_head=dim_head,
                             dot_product=dot_product, row_tile=128, q_tile=128)
        out = jax.block_until_ready(out)
        ref = reference(x, params, heads=heads, dim_head=dim_head,
                        dot_product=dot_product)
        assert out.shape == x.shape
        if not bool(jnp.allclose(out, ref, atol=2e-2, rtol=2e-2)):
            raise AssertionError(
                f"Pallas output does not match JAX reference (dot_product={dot_product})")

    print("KERNEL_OK")
</pallas_src>

<mosaic_0001>
module attributes {stable_mosaic.version = 11 : i64} {
  func.func @_norm_proj_kernel(%arg0: i32, %arg1: i32, %arg2: memref<1x128x128xf32, #tpu.memory_space<vmem>>, %arg3: memref<1x128xf32, #tpu.memory_space<vmem>>, %arg4: memref<128x128xf32, #tpu.memory_space<vmem>>, %arg5: memref<128x128xf32, #tpu.memory_space<vmem>>, %arg6: memref<128x128xf32, #tpu.memory_space<vmem>>, %arg7: memref<1x128x128xf32, #tpu.memory_space<vmem>>, %arg8: memref<1x128x128xf32, #tpu.memory_space<vmem>>, %arg9: memref<1x128x128xf32, #tpu.memory_space<vmem>>) attributes {dimension_semantics = [#tpu.dimension_semantics<parallel>, #tpu.dimension_semantics<parallel>], iteration_bounds = array<i64: 2, 2>, scalar_prefetch = 0 : i64, scratch_operands = 0 : i64, tpu.core_type = #tpu.core_type<tc>, window_params = [{transform_indices = @transform_0, window_bounds = array<i64: 1, 128, 128>}, {pipeline_mode = #tpu.pipeline_mode<synchronous>, transform_indices = @transform_1, window_bounds = array<i64: 1, 128>}, {pipeline_mode = #tpu.pipeline_mode<synchronous>, transform_indices = @transform_2, window_bounds = array<i64: 128, 128>}, {pipeline_mode = #tpu.pipeline_mode<synchronous>, transform_indices = @transform_3, window_bounds = array<i64: 128, 128>}, {pipeline_mode = #tpu.pipeline_mode<synchronous>, transform_indices = @transform_4, window_bounds = array<i64: 128, 128>}, {transform_indices = @transform_5, window_bounds = array<i64: 1, 128, 128>}, {transform_indices = @transform_6, window_bounds = array<i64: 1, 128, 128>}, {transform_indices = @transform_7, window_bounds = array<i64: 1, 128, 128>}]} {
    %c0 = arith.constant 0 : index
    %c0_0 = arith.constant 0 : index
    %c0_1 = arith.constant 0 : index
    %0 = vector.load %arg2[%c0, %c0_0, %c0_1] : memref<1x128x128xf32, #tpu.memory_space<vmem>>, vector<1x128x128xf32>
    %1 = vector.shape_cast %0 : vector<1x128x128xf32> to vector<128x128xf32>
    %2 = arith.mulf %1, %1 : vector<128x128xf32>
    %cst = arith.constant dense<0.000000e+00> : vector<128xf32>
    %3 = vector.multi_reduction <add>, %2, %cst [1] : vector<128x128xf32> to vector<128xf32>
    %4 = vector.shape_cast %3 : vector<128xf32> to vector<128x1xf32>
    %5 = math.sqrt %4 : vector<128x1xf32>
    %cst_2 = arith.constant 9.99999996E-13 : f32
    %6 = vector.broadcast %cst_2 : f32 to vector<128x1xf32>
    %7 = arith.maximumf %5, %6 : vector<128x1xf32>
    %8 = vector.broadcast %7 : vector<128x1xf32> to vector<128x128xf32>
    %9 = arith.divf %1, %8 : vector<128x128xf32>
    %cst_3 = arith.constant 11.3137083 : f32
    %10 = vector.broadcast %cst_3 : f32 to vector<128x128xf32>
    %11 = arith.mulf %9, %10 : vector<128x128xf32>
    %c0_4 = arith.constant 0 : index
    %c0_5 = arith.constant 0 : index
    %12 = vector.load %arg3[%c0_4, %c0_5] : memref<1x128xf32, #tpu.memory_space<vmem>>, vector<1x128xf32>
    %13 = vector.broadcast %12 : vector<1x128xf32> to vector<128x128xf32>
    %14 = arith.mulf %11, %13 : vector<128x128xf32>
    %c0_6 = arith.constant 0 : index
    %c0_7 = arith.constant 0 : index
    %15 = vector.load %arg4[%c0_6, %c0_7] : memref<128x128xf32, #tpu.memory_space<vmem>>, vector<128x128xf32>
    %cst_8 = arith.constant dense<0.000000e+00> : vector<128x128xf32>
    %16 = tpu.matmul %14, %15, %cst_8 {dimension_numbers = #tpu.dot_dimension_numbers<[1], [0], [0], [1], [0, 0, 1, 1], [], []>} : vector<128x128xf32>, vector<128x128xf32>, vector<128x128xf32> -> vector<128x128xf32>
    %c0_9 = arith.constant 0 : index
    %c0_10 = arith.constant 0 : index
    %c0_11 = arith.constant 0 : index
    %17 = vector.load %arg7[%c0_9, %c0_10, %c0_11] : memref<1x128x128xf32, #tpu.memory_space<vmem>>, vector<1x128x128xf32>
    %18 = vector.shape_cast %17 : vector<1x128x128xf32> to vector<128x128xf32>
    %19 = vector.shape_cast %16 : vector<128x128xf32> to vector<1x128x128xf32>
    tpu.vector_store %arg7[%c0_9, %c0_10, %c0_11], %19 {strides = array<i32>} : memref<1x128x128xf32, #tpu.memory_space<vmem>>, vector<1x128x128xf32>,
    %c0_12 = arith.constant 0 : index
    %c0_13 = arith.constant 0 : index
    %20 = vector.load %arg5[%c0_12, %c0_13] : memref<128x128xf32, #tpu.memory_space<vmem>>, vector<128x128xf32>
    %cst_14 = arith.constant dense<0.000000e+00> : vector<128x128xf32>
    %21 = tpu.matmul %14, %20, %cst_14 {dimension_numbers = #tpu.dot_dimension_numbers<[1], [0], [0], [1], [0, 0, 1, 1], [], []>} : vector<128x128xf32>, vector<128x128xf32>, vector<128x128xf32> -> vector<128x128xf32>
    %c0_15 = arith.constant 0 : index
    %c0_16 = arith.constant 0 : index
    %c0_17 = arith.constant 0 : index
    %22 = vector.load %arg8[%c0_15, %c0_16, %c0_17] : memref<1x128x128xf32, #tpu.memory_space<vmem>>, vector<1x128x128xf32>
    %23 = vector.shape_cast %22 : vector<1x128x128xf32> to vector<128x128xf32>
    %24 = vector.shape_cast %21 : vector<128x128xf32> to vector<1x128x128xf32>
    tpu.vector_store %arg8[%c0_15, %c0_16, %c0_17], %24 {strides = array<i32>} : memref<1x128x128xf32, #tpu.memory_space<vmem>>, vector<1x128x128xf32>,
    %c0_18 = arith.constant 0 : index
    %c0_19 = arith.constant 0 : index
    %25 = vector.load %arg6[%c0_18, %c0_19] : memref<128x128xf32, #tpu.memory_space<vmem>>, vector<128x128xf32>
    %cst_20 = arith.constant dense<0.000000e+00> : vector<128x128xf32>
    %26 = tpu.matmul %14, %25, %cst_20 {dimension_numbers = #tpu.dot_dimension_numbers<[1], [0], [0], [1], [0, 0, 1, 1], [], []>} : vector<128x128xf32>, vector<128x128xf32>, vector<128x128xf32> -> vector<128x128xf32>
    %c0_21 = arith.constant 0 : index
    %c0_22 = arith.constant 0 : index
    %c0_23 = arith.constant 0 : index
    %27 = vector.load %arg9[%c0_21, %c0_22, %c0_23] : memref<1x128x128xf32, #tpu.memory_space<vmem>>, vector<1x128x128xf32>
    %28 = vector.shape_cast %27 : vector<1x128x128xf32> to vector<128x128xf32>
    %29 = vector.shape_cast %26 : vector<128x128xf32> to vector<1x128x128xf32>
    tpu.vector_store %arg9[%c0_21, %c0_22, %c0_23], %29 {strides = array<i32>} : memref<1x128x128xf32, #tpu.memory_space<vmem>>, vector<1x128x128xf32>,
    return
  }
  func.func @transform_0(%arg0: i32, %arg1: i32) -> (i32, i32, i32) {
    %c0_i32 = arith.constant 0 : i32
    %c0_i32_0 = arith.constant 0 : i32
    return %arg0, %arg1, %c0_i32 : i32, i32, i32
  }
  func.func @transform_1(%arg0: i32, %arg1: i32) -> (i32, i32) {
    %c0_i32 = arith.constant 0 : i32
    %c0_i32_0 = arith.constant 0 : i32
    %c0_i32_1 = arith.constant 0 : i32
    return %c0_i32, %c0_i32_0 : i32, i32
  }
  func.func @transform_2(%arg0: i32, %arg1: i32) -> (i32, i32) {
    %c0_i32 = arith.constant 0 : i32
    %c0_i32_0 = arith.constant 0 : i32
    %c0_i32_1 = arith.constant 0 : i32
    return %c0_i32, %c0_i32_0 : i32, i32
  }
  func.func @transform_3(%arg0: i32, %arg1: i32) -> (i32, i32) {
    %c0_i32 = arith.constant 0 : i32
    %c0_i32_0 = arith.constant 0 : i32
    %c0_i32_1 = arith.constant 0 : i32
    return %c0_i32, %c0_i32_0 : i32, i32
  }
  func.func @transform_4(%arg0: i32, %arg1: i32) -> (i32, i32) {
    %c0_i32 = arith.constant 0 : i32
    %c0_i32_0 = arith.constant 0 : i32
    %c0_i32_1 = arith.constant 0 : i32
    return %c0_i32, %c0_i32_0 : i32, i32
  }
  func.func @transform_5(%arg0: i32, %arg1: i32) -> (i32, i32, i32) {
    %c0_i32 = arith.constant 0 : i32
    %c0_i32_0 = arith.constant 0 : i32
    return %arg0, %arg1, %c0_i32 : i32, i32, i32
  }
  func.func @transform_6(%arg0: i32, %arg1: i32) -> (i32, i32, i32) {
    %c0_i32 = arith.constant 0 : i32
    %c0_i32_0 = arith.constant 0 : i32
    return %arg0, %arg1, %c0_i32 : i32, i32, i32
  }
  func.func @transform_7(%arg0: i32, %arg1: i32) -> (i32, i32, i32) {
    %c0_i32 = arith.constant 0 : i32
    %c0_i32_0 = arith.constant 0 : i32
    return %arg0, %arg1, %c0_i32 : i32, i32, i32
  }
}

</mosaic_0001>

<llo_original>
// kernel: tpu_custom_call.1
$region0: #{tpu_custom_call.1}
  #allocation0 [shape = 'u32[]', space=smem, size = 0x4, offset = 0x4, fixed_abs, tag = 'smem constant byte address 0x4 - core index']
  #allocation1 [shape = 'u32[144,128]{1,0:T(1,128)}', space=vmem, size = 0x12000, scoped, tag = 'internal scratch']
  %s0 = inlined_call_operand.hbm [shape: f32[2,256,128], index: 0, kind: input, shape index: {}]
  %s1 = inlined_call_operand.hbm [shape: f32[1,128], index: 1, kind: input, shape index: {}]
  %s2 = inlined_call_operand.hbm [shape: f32[128,128], index: 2, kind: input, shape index: {}]
  %s3 = inlined_call_operand.hbm [shape: f32[128,128], index: 3, kind: input, shape index: {}]
  %s4 = inlined_call_operand.hbm [shape: f32[128,128], index: 4, kind: input, shape index: {}]
  %s5 = inlined_call_operand.hbm [shape: f32[2,256,128], index: 5, kind: output, shape index: {0}]
  %s6 = inlined_call_operand.hbm [shape: f32[2,256,128], index: 6, kind: output, shape index: {1}]
  %s7 = inlined_call_operand.hbm [shape: f32[2,256,128], index: 7, kind: output, shape index: {2}]
  %8 = xla_tuple %s5, %s6, %s7
  %s9 = sld [smem:[#allocation0]]
  $region89: #{tpu_custom_call.1} parent=0
    _
  %s11 = ssub.s32 1, %s9
  %s12 = scalar_select 0, %s11, %s9
  $region1: #{tpu_custom_call.1} parent=0
    #allocation2 [shape = 'u8[131072]{0}', space=vmem, size = 0x20000, scoped, tag = 'input window, operand 0']
    #allocation3 [shape = 's32[2]{0}', space=sflag, size = 0x8, scoped, tag = 'scoped memory for tpu_custom_call.1']
    #allocation4 [shape = 's32[2]{0}', space=sflag, size = 0x8, scoped, tag = 'scoped memory for tpu_custom_call.1']
    #allocation5 [shape = 'u8[512]{0}', space=vmem, size = 0x400, scoped, tag = 'input window, operand 1, single buffered']
    #allocation6 [shape = 's32[1]{0}', space=sflag, size = 0x4, scoped, tag = 'scoped memory for tpu_custom_call.1']
    #allocation7 [shape = 'u8[65536]{0}', space=vmem, size = 0x10000, scoped, tag = 'input window, operand 2, single buffered']
    #allocation8 [shape = 'u8[65536]{0}', space=vmem, size = 0x10000, scoped, tag = 'input window, operand 3, single buffered']
    #allocation9 [shape = 's32[1]{0}', space=sflag, size = 0x4, scoped, tag = 'scoped memory for tpu_custom_call.1']
    #allocation10 [shape = 'u8[65536]{0}', space=vmem, size = 0x10000, scoped, tag = 'input window, operand 4, single buffered']
    #allocation11 [shape = 'u8[131072]{0}', space=vmem, size = 0x20000, scoped, tag = 'output window, operand 0']
    #allocation12 [shape = 'u8[131072]{0}', space=vmem, size = 0x20000, scoped, tag = 'output window, operand 1']
    #allocation13 [shape = 's32[2]{0}', space=sflag, size = 0x8, scoped, tag = 'scoped memory for tpu_custom_call.1']
    #allocation14 [shape = 'u8[131072]{0}', space=vmem, size = 0x20000, scoped, tag = 'output window, operand 2']
    %13 = vsyncpa [#allocation3], 0
    %s14 = scalar_lea.sflag [#allocation3], 1
    %15 = vsyncpa %s14, 0
    %16 = vsyncpa [#allocation6], 0
    %17 = vsyncpa [#allocation9], 0
    %18 = vsyncpa [#allocation4], 0
    %s19 = scalar_lea.sflag [#allocation4], 1
    %20 = vsyncpa %s19, 0
    %21 = vsyncpa [#allocation13], 0
    %s22 = scalar_lea.sflag [#allocation13], 1
    %23 = vsyncpa %s22, 0
    loop: start=0, step=1, limit=6
    $region2: #{tpu_custom_call.1} parent=1 // loop_pre_header
      _
    $region3: #{tpu_custom_call.1} parent=1 // loop_header
      %s25 = sphi 0, %s29
      %p26 = scmp.ge.s32.totalorder %s25, 6
      %s32 = sphi 0, %s44
      %s33 = sphi 0, %s40
      %s34 = sphi 0, %s32
      %s35 = sphi 0, %s33
      %s36 = sphi 0, %s34
      %s37 = sphi 0, %s35
      %s49 = sphi 0, %s51
      %s52 = sphi 0, %s49
      %s53 = sphi 0, %s52
      %s69 = sphi 0, %s53
      %s73 = sphi 0, %s73
      %s75 = sphi 0, %s73
      %s76 = sphi 0, %s75
      %s90 = sphi 0, %s76
      %s94 = sphi 0, %s94
      %s96 = sphi 0, %s94
      %s97 = sphi 0, %s96
      %s111 = sphi 0, %s97
      %s115 = sphi 0, %s115
      %s117 = sphi 0, %s115
      %s118 = sphi 0, %s117
      %s132 = sphi 0, %s118
      %s136 = sphi 0, %s136
      %s138 = sphi 0, %s136
      %s139 = sphi 0, %s138
      %s153 = sphi 0, %s139
      %s161 = sphi 0, %s163
      %s164 = sphi 0, %s161
      %s165 = sphi 0, %s164
      %s181 = sphi 0, %s165
      %s189 = sphi 0, %s191
      %s192 = sphi 0, %s189
      %s193 = sphi 0, %s192
      %s209 = sphi 0, %s193
      %s217 = sphi 0, %s219
      %s220 = sphi 0, %s217
      %s221 = sphi 0, %s220
      %s237 = sphi 0, %s221
    $region4: #{tpu_custom_call.1} parent=1 // loop_header_branch
      %28 = sbr.rel (%p26) target = $region8
    $region5: #{tpu_custom_call.1} parent=1 // loop_body
      %s30 = ssub.s32 %s25, 1
      %s31 = ssub.s32 %s25, 2
      %s38 = sadd.s32 1, %s33
      %p39 = scmp.ge.s32.totalorder %s38, 2
      %s40 = scalar_select %p39, 0, %s38
      %s41 = sadd.s32 1, %s32
      %s42 = scalar_select %p39, %s41, %s32
      %p43 = scmp.ge.s32.totalorder %s42, 2
      %s44 = scalar_select %p43, 0, %s42
      %s45 = ssub.s32 %s32, %s44
      %s46 = ssub.s32 %s33, %s40
      %s47 = sor.u32 %s45, %s46
      %p48 = scmp.eq.s32.totalorder %s47, 0
      %s50 = sadd.s32 %s49, 1
      %s51 = scalar_select %p48, %s49, %s50
      %p54 = pneg %p48
      %p55 = scmp.eq.s32.totalorder %s25, 3
      %p56 = por %p54, %p55
      %p57 = scmp.ne.s32.totalorder %s49, %s52
      %p58 = scmp.eq.s32.totalorder %s25, 0
      %p59 = por %p57, %p58
      %p60 = scmp.ne.s32.totalorder %s49, %s52
      %p61 = scmp.eq.s32.totalorder %s30, 3
      %p62 = por %p60, %p61
      %p63 = scmp.ne.s32.totalorder %s52, %s53
      %p64 = scmp.eq.s32.totalorder %s30, 0
      %p65 = por %p63, %p64
      %p66 = scmp.ne.s32.totalorder %s52, %s53
      %p67 = scmp.eq.s32.totalorder %s31, 3
      %p68 = por %p66, %p67
      %p70 = scmp.ne.s32.totalorder %s53, %s69
      %p71 = scmp.eq.s32.totalorder %s31, 0
      %p72 = por %p70, %p71
      %s74 = sadd.s32 %s73, 1
      %p77 = scmp.eq.s32.totalorder %s25, 3
      %p78 = scmp.ne.s32.totalorder %s73, %s75
      %p79 = scmp.eq.s32.totalorder %s25, 0
      %p80 = por %p78, %p79
      %p81 = scmp.ne.s32.totalorder %s73, %s75
      %p82 = scmp.eq.s32.totalorder %s30, 3
      %p83 = por %p81, %p82
      %p84 = scmp.ne.s32.totalorder %s75, %s76
      %p85 = scmp.eq.s32.totalorder %s30, 0
      %p86 = por %p84, %p85
      %p87 = scmp.ne.s32.totalorder %s75, %s76
      %p88 = scmp.eq.s32.totalorder %s31, 3
      %p89 = por %p87, %p88
      %p91 = scmp.ne.s32.totalorder %s76, %s90
      %p92 = scmp.eq.s32.totalorder %s31, 0
      %p93 = por %p91, %p92
      %s95 = sadd.s32 %s94, 1
      %p98 = scmp.eq.s32.totalorder %s25, 3
      %p99 = scmp.ne.s32.totalorder %s94, %s96
      %p100 = scmp.eq.s32.totalorder %s25, 0
      %p101 = por %p99, %p100
      %p102 = scmp.ne.s32.totalorder %s94, %s96
      %p103 = scmp.eq.s32.totalorder %s30, 3
      %p104 = por %p102, %p103
      %p105 = scmp.ne.s32.totalorder %s96, %s97
      %p106 = scmp.eq.s32.totalorder %s30, 0
      %p107 = por %p105, %p106
      %p108 = scmp.ne.s32.totalorder %s96, %s97
      %p109 = scmp.eq.s32.totalorder %s31, 3
      %p110 = por %p108, %p109
      %p112 = scmp.ne.s32.totalorder %s97, %s111
      %p113 = scmp.eq.s32.totalorder %s31, 0
      %p114 = por %p112, %p113
      %s116 = sadd.s32 %s115, 1
      %p119 = scmp.eq.s32.totalorder %s25, 3
      %p120 = scmp.ne.s32.totalorder %s115, %s117
      %p121 = scmp.eq.s32.totalorder %s25, 0
      %p122 = por %p120, %p121
      %p123 = scmp.ne.s32.totalorder %s115, %s117
      %p124 = scmp.eq.s32.totalorder %s30, 3
      %p125 = por %p123, %p124
      %p126 = scmp.ne.s32.totalorder %s117, %s118
      %p127 = scmp.eq.s32.totalorder %s30, 0
      %p128 = por %p126, %p127
      %p129 = scmp.ne.s32.totalorder %s117, %s118
      %p130 = scmp.eq.s32.totalorder %s31, 3
      %p131 = por %p129, %p130
      %p133 = scmp.ne.s32.totalorder %s118, %s132
      %p134 = scmp.eq.s32.totalorder %s31, 0
      %p135 = por %p133, %p134
      %s137 = sadd.s32 %s136, 1
      %p140 = scmp.eq.s32.totalorder %s25, 3
      %p141 = scmp.ne.s32.totalorder %s136, %s138
      %p142 = scmp.eq.s32.totalorder %s25, 0
      %p143 = por %p141, %p142
      %p144 = scmp.ne.s32.totalorder %s136, %s138
      %p145 = scmp.eq.s32.totalorder %s30, 3
      %p146 = por %p144, %p145
      %p147 = scmp.ne.s32.totalorder %s138, %s139
      %p148 = scmp.eq.s32.totalorder %s30, 0
      %p149 = por %p147, %p148
      %p150 = scmp.ne.s32.totalorder %s138, %s139
      %p151 = scmp.eq.s32.totalorder %s31, 3
      %p152 = por %p150, %p151
      %p154 = scmp.ne.s32.totalorder %s139, %s153
      %p155 = scmp.eq.s32.totalorder %s31, 0
      %p156 = por %p154, %p155
      %s157 = ssub.s32 %s32, %s44
      %s158 = ssub.s32 %s33, %s40
      %s159 = sor.u32 %s157, %s158
      %p160 = scmp.eq.s32.totalorder %s159, 0
      %s162 = sadd.s32 %s161, 1
      %s163 = scalar_select %p160, %s161, %s162
      %p166 = pneg %p160
      %p167 = scmp.eq.s32.totalorder %s25, 3
      %p168 = por %p166, %p167
      %p169 = scmp.ne.s32.totalorder %s161, %s164
      %p170 = scmp.eq.s32.totalorder %s25, 0
      %p171 = por %p169, %p170
      %p172 = scmp.ne.s32.totalorder %s161, %s164
      %p173 = scmp.eq.s32.totalorder %s30, 3
      %p174 = por %p172, %p173
      %p175 = scmp.ne.s32.totalorder %s164, %s165
      %p176 = scmp.eq.s32.totalorder %s30, 0
      %p177 = por %p175, %p176
      %p178 = scmp.ne.s32.totalorder %s164, %s165
      %p179 = scmp.eq.s32.totalorder %s31, 3
      %p180 = por %p178, %p179
      %p182 = scmp.ne.s32.totalorder %s165, %s181
      %p183 = scmp.eq.s32.totalorder %s31, 0
      %p184 = por %p182, %p183
      %s185 = ssub.s32 %s32, %s44
      %s186 = ssub.s32 %s33, %s40
      %s187 = sor.u32 %s185, %s186
      %p188 = scmp.eq.s32.totalorder %s187, 0
      %s190 = sadd.s32 %s189, 1
      %s191 = scalar_select %p188, %s189, %s190
      %p194 = pneg %p188
      %p195 = scmp.eq.s32.totalorder %s25, 3
      %p196 = por %p194, %p195
      %p197 = scmp.ne.s32.totalorder %s189, %s192
      %p198 = scmp.eq.s32.totalorder %s25, 0
      %p199 = por %p197, %p198
      %p200 = scmp.ne.s32.totalorder %s189, %s192
      %p201 = scmp.eq.s32.totalorder %s30, 3
      %p202 = por %p200, %p201
      %p203 = scmp.ne.s32.totalorder %s192, %s193
      %p204 = scmp.eq.s32.totalorder %s30, 0
      %p205 = por %p203, %p204
      %p206 = scmp.ne.s32.totalorder %s192, %s193
      %p207 = scmp.eq.s32.totalorder %s31, 3
      %p208 = por %p206, %p207
      %p210 = scmp.ne.s32.totalorder %s193, %s209
      %p211 = scmp.eq.s32.totalorder %s31, 0
      %p212 = por %p210, %p211
      %s213 = ssub.s32 %s32, %s44
      %s214 = ssub.s32 %s33, %s40
      %s215 = sor.u32 %s213, %s214
      %p216 = scmp.eq.s32.totalorder %s215, 0
      %s218 = sadd.s32 %s217, 1
      %s219 = scalar_select %p216, %s217, %s218
      %p222 = pneg %p216
      %p223 = scmp.eq.s32.totalorder %s25, 3
      %p224 = por %p222, %p223
      %p225 = scmp.ne.s32.totalorder %s217, %s220
      %p226 = scmp.eq.s32.totalorder %s25, 0
      %p227 = por %p225, %p226
      %p228 = scmp.ne.s32.totalorder %s217, %s220
      %p229 = scmp.eq.s32.totalorder %s30, 3
      %p230 = por %p228, %p229
      %p231 = scmp.ne.s32.totalorder %s220, %s221
      %p232 = scmp.eq.s32.totalorder %s30, 0
      %p233 = por %p231, %p232
      %p234 = scmp.ne.s32.totalorder %s220, %s221
      %p235 = scmp.eq.s32.totalorder %s31, 3
      %p236 = por %p234, %p235
      %p238 = scmp.ne.s32.totalorder %s221, %s237
      %p239 = scmp.eq.s32.totalorder %s31, 0
      %p240 = por %p238, %p239
      %p241 = scmp.le.s32.totalorder 1, %s25
      %p242 = scmp.lt.s32.totalorder %s25, 5
      %p243 = pnand %p241, %p242
      %p244 = pneg %p243
      // Predicated region
      $region9: #{tpu_custom_call.1} parent=5 // pred_check
        _
      $region10: #{tpu_custom_call.1} parent=5 // pred_check_branch
        %246 = sbr.rel (%p243) target = $region12
      $region11: #{tpu_custom_call.1} parent=5 // pred_region
        %s247 = ssub.s32 %s25, 1
        // Predicated region
        $region13: #{tpu_custom_call.1} parent=11 // pred_check
          %p248 = pneg %p86
        $region14: #{tpu_custom_call.1} parent=11 // pred_check_branch
          %250 = sbr.rel (%p248) target = $region16
        $region15: #{tpu_custom_call.1} parent=11 // pred_region
          %s252 = ssub.s32 16, 16
          %253 = vsyncadd [#allocation6], %s252
          %s255 = sshll.u32 [#allocation5], 4
          %s256 = int_to_ptr.vmem [resolvable:$true] %s255
          %258 = dma.hbm_to_vmem [thread:$0]  %s1, 16, %s256, [#allocation6]
        $region16: #{tpu_custom_call.1} parent=11 // pred_fallthru
          _
        // Predicated region
        $region17: #{tpu_custom_call.1} parent=11 // pred_check
          %p259 = pneg %p107
        $region18: #{tpu_custom_call.1} parent=11 // pred_check_branch
          %261 = sbr.rel (%p259) target = $region20
        $region19: #{tpu_custom_call.1} parent=11 // pred_region
          %s263 = ssub.s32 2048, 2048
          %264 = vsyncadd [#allocation6], %s263
          %s265 = sshll.u32 [#allocation7], 4
          %s266 = int_to_ptr.vmem [resolvable:$true] %s265
          %271 = dma.hbm_to_vmem [thread:$0]  %s2, 2048, %s266, [#allocation6], 128, 128, 8
        $region20: #{tpu_custom_call.1} parent=11 // pred_fallthru
          _
        // Predicated region
        $region21: #{tpu_custom_call.1} parent=11 // pred_check
          %p272 = pneg %p128
        $region22: #{tpu_custom_call.1} parent=11 // pred_check_branch
          %274 = sbr.rel (%p272) target = $region24
        $region23: #{tpu_custom_call.1} parent=11 // pred_region
          %s276 = ssub.s32 2048, 2048
          %277 = vsyncadd [#allocation9], %s276
          %s278 = sshll.u32 [#allocation8], 4
          %s279 = int_to_ptr.vmem [resolvable:$true] %s278
          %284 = dma.hbm_to_vmem [thread:$0]  %s3, 2048, %s279, [#allocation9], 128, 128, 8
        $region24: #{tpu_custom_call.1} parent=11 // pred_fallthru
          _
        // Predicated region
        $region25: #{tpu_custom_call.1} parent=11 // pred_check
          %p285 = pneg %p149
        $region26: #{tpu_custom_call.1} parent=11 // pred_check_branch
          %287 = sbr.rel (%p285) target = $region28
        $region27: #{tpu_custom_call.1} parent=11 // pred_region
          %s289 = ssub.s32 2048, 2048
          %290 = vsyncadd [#allocation9], %s289
          %s291 = sshll.u32 [#allocation10], 4
          %s292 = int_to_ptr.vmem [resolvable:$true] %s291
          %297 = dma.hbm_to_vmem [thread:$0]  %s4, 2048, %s292, [#allocation9], 128, 128, 8
        $region28: #{tpu_custom_call.1} parent=11 // pred_fallthru
          _
      $region12: #{tpu_custom_call.1} parent=5 // pred_fallthru
        _
      %p298 = scmp.lt.s32.totalorder %s25, 4
      // Predicated region
      $region29: #{tpu_custom_call.1} parent=5 // pred_check
        %p299 = pneg %p298
      $region30: #{tpu_custom_call.1} parent=5 // pred_check_branch
        %301 = sbr.rel (%p299) target = $region32
      $region31: #{tpu_custom_call.1} parent=5 // pred_region
        // Predicated region
        $region33: #{tpu_custom_call.1} parent=31 // pred_check
          %p302 = pneg %p59
        $region34: #{tpu_custom_call.1} parent=31 // pred_check_branch
          %304 = sbr.rel (%p302) target = $region36
        $region35: #{tpu_custom_call.1} parent=31 // pred_region
          %s305 = sand.u32 %s49, 1
          %s306 = scalar_lea.sflag [#allocation3], %s305
          %s307 = sand.u32 %s49, 1
          %s308 = smul.addr %s307, 128
          %s309 = scalar_lea.vmem [#allocation2], %s308
          %s310 = smul.u32 16, %s33
          %s312 = ssub.s32 2048, 2048
          %313 = vsyncadd %s306, %s312
          %s314 = smul.addr %s32, 32
          %s315 = sadd.s32 %s310, %s314
          %s316 = smul.addr %s315, 128
          %s317 = scalar_lea.hbm %s0, %s316
          %s318 = sshll.u32 %s309, 4
          %s319 = int_to_ptr.vmem [resolvable:$true] %s318
          %324 = dma.hbm_to_vmem [thread:$0]  %s317, 2048, %s319, %s306, 128, 128, 8
        $region36: #{tpu_custom_call.1} parent=31 // pred_fallthru
          _
      $region32: #{tpu_custom_call.1} parent=5 // pred_fallthru
        _
      %p325 = scmp.le.s32.totalorder 1, %s25
      %p326 = scmp.lt.s32.totalorder %s25, 5
      %p327 = pnand %p325, %p326
      %p328 = pneg %p327
      // Predicated region
      $region37: #{tpu_custom_call.1} parent=5 // pred_check
        _
      $region38: #{tpu_custom_call.1} parent=5 // pred_check_branch
        %330 = sbr.rel (%p327) target = $region40
      $region39: #{tpu_custom_call.1} parent=5 // pred_region
        %s331 = ssub.s32 %s25, 1
        %s332 = sand.u32 %s52, 1
        %s333 = scalar_lea.sflag [#allocation3], %s332
        %s334 = sand.u32 %s52, 1
        %s335 = smul.addr %s334, 128
        %s336 = scalar_lea.vmem [#allocation2], %s335
        // Predicated region
        $region41: #{tpu_custom_call.1} parent=39 // pred_check
          %p337 = pneg %p65
        $region42: #{tpu_custom_call.1} parent=39 // pred_check_branch
          %339 = sbr.rel (%p337) target = $region44
        $region43: #{tpu_custom_call.1} parent=39 // pred_region
          %340 = dma.done %s333, 2048
        $region44: #{tpu_custom_call.1} parent=39 // pred_fallthru
          _
        // Predicated region
        $region45: #{tpu_custom_call.1} parent=39 // pred_check
          %p341 = pneg %p86
        $region46: #{tpu_custom_call.1} parent=39 // pred_check_branch
          %343 = sbr.rel (%p341) target = $region48
        $region47: #{tpu_custom_call.1} parent=39 // pred_region
          %344 = dma.done [#allocation6], 16
        $region48: #{tpu_custom_call.1} parent=39 // pred_fallthru
          _
        // Predicated region
        $region49: #{tpu_custom_call.1} parent=39 // pred_check
          %p345 = pneg %p107
        $region50: #{tpu_custom_call.1} parent=39 // pred_check_branch
          %347 = sbr.rel (%p345) target = $region52
        $region51: #{tpu_custom_call.1} parent=39 // pred_region
          %348 = dma.done [#allocation6], 2048
        $region52: #{tpu_custom_call.1} parent=39 // pred_fallthru
          _
        // Predicated region
        $region53: #{tpu_custom_call.1} parent=39 // pred_check
          %p349 = pneg %p128
        $region54: #{tpu_custom_call.1} parent=39 // pred_check_branch
          %351 = sbr.rel (%p349) target = $region56
        $region55: #{tpu_custom_call.1} parent=39 // pred_region
          %352 = dma.done [#allocation9], 2048
        $region56: #{tpu_custom_call.1} parent=39 // pred_fallthru
          _
        // Predicated region
        $region57: #{tpu_custom_call.1} parent=39 // pred_check
          %p353 = pneg %p149
        $region58: #{tpu_custom_call.1} parent=39 // pred_check_branch
          %355 = sbr.rel (%p353) target = $region60
        $region59: #{tpu_custom_call.1} parent=39 // pred_region
          %356 = dma.done [#allocation9], 2048
        $region60: #{tpu_custom_call.1} parent=39 // pred_fallthru
          _
        %s357 = sand.u32 %s52, 1
        %s358 = scalar_lea.sflag [#allocation3], %s357
        %s359 = sand.u32 %s52, 1
        %s360 = smul.addr %s359, 128
        %s361 = scalar_lea.vmem [#allocation2], %s360
        %p362 = pneg %p65
        %p363 = pneg %p62
        %p364 = pneg %p86
        %p365 = pneg %p83
        %p366 = pneg %p107
        %p367 = pneg %p104
        %p368 = pneg %p128
        %p369 = pneg %p125
        %p370 = pneg %p149
        %p371 = pneg %p146
        %p372 = pneg %p177
        %p373 = pneg %p174
        %s374 = sand.u32 %s164, 1
        %s375 = scalar_lea.sflag [#allocation4], %s374
        %s376 = sand.u32 %s164, 1
        %s377 = smul.addr %s376, 128
        %s378 = scalar_lea.vmem [#allocation11], %s377
        %p379 = pneg %p205
        %p380 = pneg %p202
        %s381 = sand.u32 %s30, 1
        %s382 = scalar_lea.sflag [#allocation13], %s381
        %s383 = sand.u32 %s192, 1
        %s384 = smul.addr %s383, 128
        %s385 = scalar_lea.vmem [#allocation12], %s384
        %p386 = pneg %p233
        %p387 = pneg %p230
        %s388 = sand.u32 %s30, 1
        %s389 = scalar_lea.sflag [#allocation13], %s388
        %s390 = sand.u32 %s220, 1
        %s391 = smul.addr %s390, 128
        %s392 = scalar_lea.vmem [#allocation14], %s391
        %s393 = smul.u32 16, %s35
        %s394 = smul.u32 16, %s35
        %s395 = smul.u32 16, %s35
        %s396 = smul.u32 16, %s35
        %v397 = vld [vmem:[%s336] sm:$0xff]
        %v398 = vld [vmem:[%s336 + $0x8] sm:$0xff]
        %v399 = vld [vmem:[%s336 + $0x10] sm:$0xff]
        %v400 = vld [vmem:[%s336 + $0x18] sm:$0xff]
        %v401 = vld [vmem:[%s336 + $0x20] sm:$0xff]
        %v402 = vld [vmem:[%s336 + $0x28] sm:$0xff]
        %v403 = vld [vmem:[%s336 + $0x30] sm:$0xff]
        %v404 = vld [vmem:[%s336 + $0x38] sm:$0xff]
        %v405 = vld [vmem:[%s336 + $0x40] sm:$0xff]
        %v406 = vld [vmem:[%s336 + $0x48] sm:$0xff]
        %v407 = vld [vmem:[%s336 + $0x50] sm:$0xff]
        %v408 = vld [vmem:[%s336 + $0x58] sm:$0xff]
        %v409 = vld [vmem:[%s336 + $0x60] sm:$0xff]
        %v410 = vld [vmem:[%s336 + $0x68] sm:$0xff]
        %v411 = vld [vmem:[%s336 + $0x70] sm:$0xff]
        %v412 = vld [vmem:[%s336 + $0x78] sm:$0xff]
        %v413 = vmul.f32 %v397, %v397
        %v414 = vmul.f32 %v398, %v398
        %v415 = vmul.f32 %v399, %v399
        %v416 = vmul.f32 %v400, %v400
        %v417 = vmul.f32 %v401, %v401
        %v418 = vmul.f32 %v402, %v402
        %v419 = vmul.f32 %v403, %v403
        %v420 = vmul.f32 %v404, %v404
        %v421 = vmul.f32 %v405, %v405
        %v422 = vmul.f32 %v406, %v406
        %v423 = vmul.f32 %v407, %v407
        %v424 = vmul.f32 %v408, %v408
        %v425 = vmul.f32 %v409, %v409
        %v426 = vmul.f32 %v410, %v410
        %v427 = vmul.f32 %v411, %v411
        %v428 = vmul.f32 %v412, %v412
        %429 = vadd.xlane.f32.xlu0 %v413
        %v430 = vpop.xlane.xlu0 %429
        %431 = vadd.xlane.f32.xlu0 %v414
        %v432 = vpop.xlane.xlu0 %431
        %433 = vadd.xlane.f32.xlu0 %v415
        %v434 = vpop.xlane.xlu0 %433
        %435 = vadd.xlane.f32.xlu0 %v416
        %v436 = vpop.xlane.xlu0 %435
        %437 = vadd.xlane.f32.xlu0 %v417
        %v438 = vpop.xlane.xlu0 %437
        %439 = vadd.xlane.f32.xlu0 %v418
        %v440 = vpop.xlane.xlu0 %439
        %441 = vadd.xlane.f32.xlu0 %v419
        %v442 = vpop.xlane.xlu0 %441
        %443 = vadd.xlane.f32.xlu0 %v420
        %v444 = vpop.xlane.xlu0 %443
        %445 = vadd.xlane.f32.xlu0 %v421
        %v446 = vpop.xlane.xlu0 %445
        %447 = vadd.xlane.f32.xlu0 %v422
        %v448 = vpop.xlane.xlu0 %447
        %449 = vadd.xlane.f32.xlu0 %v423
        %v450 = vpop.xlane.xlu0 %449
        %451 = vadd.xlane.f32.xlu0 %v424
        %v452 = vpop.xlane.xlu0 %451
        %453 = vadd.xlane.f32.xlu0 %v425
        %v454 = vpop.xlane.xlu0 %453
        %455 = vadd.xlane.f32.xlu0 %v426
        %v456 = vpop.xlane.xlu0 %455
        %457 = vadd.xlane.f32.xlu0 %v427
        %v458 = vpop.xlane.xlu0 %457
        %459 = vadd.xlane.f32.xlu0 %v428
        %v460 = vpop.xlane.xlu0 %459
        %v461 = vrsqrt.pop %v430
        %v462 = vmul.f32 %v430, %v461
        %vm463 = vcmp.eq.f32.partialorder %v430, inf
        %v464 = vsel %vm463, %v430, %v462
        %vm465 = vcmp.eq.f32.partialorder %v430, 0.0
        %v466 = vand.u32 %v430, 2147483648
        %v467 = vsel %vm465, %v466, %v464
        %v468 = vrsqrt.pop %v432
        %v469 = vmul.f32 %v432, %v468
        %vm470 = vcmp.eq.f32.partialorder %v432, inf
        %v471 = vsel %vm470, %v432, %v469
        %vm472 = vcmp.eq.f32.partialorder %v432, 0.0
        %v473 = vand.u32 %v432, 2147483648
        %v474 = vsel %vm472, %v473, %v471
        %v475 = vrsqrt.pop %v434
        %v476 = vmul.f32 %v434, %v475
        %vm477 = vcmp.eq.f32.partialorder %v434, inf
        %v478 = vsel %vm477, %v434, %v476
        %vm479 = vcmp.eq.f32.partialorder %v434, 0.0
        %v480 = vand.u32 %v434, 2147483648
        %v481 = vsel %vm479, %v480, %v478
        %v482 = vrsqrt.pop %v436
        %v483 = vmul.f32 %v436, %v482
        %vm484 = vcmp.eq.f32.partialorder %v436, inf
        %v485 = vsel %vm484, %v436, %v483
        %vm486 = vcmp.eq.f32.partialorder %v436, 0.0
        %v487 = vand.u32 %v436, 2147483648
        %v488 = vsel %vm486, %v487, %v485
        %v489 = vrsqrt.pop %v438
        %v490 = vmul.f32 %v438, %v489
        %vm491 = vcmp.eq.f32.partialorder %v438, inf
        %v492 = vsel %vm491, %v438, %v490
        %vm493 = vcmp.eq.f32.partialorder %v438, 0.0
        %v494 = vand.u32 %v438, 2147483648
        %v495 = vsel %vm493, %v494, %v492
        %v496 = vrsqrt.pop %v440
        %v497 = vmul.f32 %v440, %v496
        %vm498 = vcmp.eq.f32.partialorder %v440, inf
        %v499 = vsel %vm498, %v440, %v497
        %vm500 = vcmp.eq.f32.partialorder %v440, 0.0
        %v501 = vand.u32 %v440, 2147483648
        %v502 = vsel %vm500, %v501, %v499
        %v503 = vrsqrt.pop %v442
        %v504 = vmul.f32 %v442, %v503
        %vm505 = vcmp.eq.f32.partialorder %v442, inf
        %v506 = vsel %vm505, %v442, %v504
        %vm507 = vcmp.eq.f32.partialorder %v442, 0.0
        %v508 = vand.u32 %v442, 2147483648
        %v509 = vsel %vm507, %v508, %v506
        %v510 = vrsqrt.pop %v444
        %v511 = vmul.f32 %v444, %v510
        %vm512 = vcmp.eq.f32.partialorder %v444, inf
        %v513 = vsel %vm512, %v444, %v511
        %vm514 = vcmp.eq.f32.partialorder %v444, 0.0
        %v515 = vand.u32 %v444, 2147483648
        %v516 = vsel %vm514, %v515, %v513
        %v517 = vrsqrt.pop %v446
        %v518 = vmul.f32 %v446, %v517
        %vm519 = vcmp.eq.f32.partialorder %v446, inf
        %v520 = vsel %vm519, %v446, %v518
        %vm521 = vcmp.eq.f32.partialorder %v446, 0.0
        %v522 = vand.u32 %v446, 2147483648
        %v523 = vsel %vm521, %v522, %v520
        %v524 = vrsqrt.pop %v448
        %v525 = vmul.f32 %v448, %v524
        %vm526 = vcmp.eq.f32.partialorder %v448, inf
        %v527 = vsel %vm526, %v448, %v525
        %vm528 = vcmp.eq.f32.partialorder %v448, 0.0
        %v529 = vand.u32 %v448, 2147483648
        %v530 = vsel %vm528, %v529, %v527
        %v531 = vrsqrt.pop %v450
        %v532 = vmul.f32 %v450, %v531
        %vm533 = vcmp.eq.f32.partialorder %v450, inf
        %v534 = vsel %vm533, %v450, %v532
        %vm535 = vcmp.eq.f32.partialorder %v450, 0.0
        %v536 = vand.u32 %v450, 2147483648
        %v537 = vsel %vm535, %v536, %v534
        %v538 = vrsqrt.pop %v452
        %v539 = vmul.f32 %v452, %v538
        %vm540 = vcmp.eq.f32.partialorder %v452, inf
        %v541 = vsel %vm540, %v452, %v539
        %vm542 = vcmp.eq.f32.partialorder %v452, 0.0
        %v543 = vand.u32 %v452, 2147483648
        %v544 = vsel %vm542, %v543, %v541
        %v545 = vrsqrt.pop %v454
        %v546 = vmul.f32 %v454, %v545
        %vm547 = vcmp.eq.f32.partialorder %v454, inf
        %v548 = vsel %vm547, %v454, %v546
        %vm549 = vcmp.eq.f32.partialorder %v454, 0.0
        %v550 = vand.u32 %v454, 2147483648
        %v551 = vsel %vm549, %v550, %v548
        %v552 = vrsqrt.pop %v456
        %v553 = vmul.f32 %v456, %v552
        %vm554 = vcmp.eq.f32.partialorder %v456, inf
        %v555 = vsel %vm554, %v456, %v553
        %vm556 = vcmp.eq.f32.partialorder %v456, 0.0
        %v557 = vand.u32 %v456, 2147483648
        %v558 = vsel %vm556, %v557, %v555
        %v559 = vrsqrt.pop %v458
        %v560 = vmul.f32 %v458, %v559
        %vm561 = vcmp.eq.f32.partialorder %v458, inf
        %v562 = vsel %vm561, %v458, %v560
        %vm563 = vcmp.eq.f32.partialorder %v458, 0.0
        %v564 = vand.u32 %v458, 2147483648
        %v565 = vsel %vm563, %v564, %v562
        %v566 = vrsqrt.pop %v460
        %v567 = vmul.f32 %v460, %v566
        %vm568 = vcmp.eq.f32.partialorder %v460, inf
        %v569 = vsel %vm568, %v460, %v567
        %vm570 = vcmp.eq.f32.partialorder %v460, 0.0
        %v571 = vand.u32 %v460, 2147483648
        %v572 = vsel %vm570, %v571, %v569
        %v573 = vmax.f32 %v467, 1e-12
        %v574 = vmax.f32 %v474, 1e-12
        %v575 = vmax.f32 %v481, 1e-12
        %v576 = vmax.f32 %v488, 1e-12
        %v577 = vmax.f32 %v495, 1e-12
        %v578 = vmax.f32 %v502, 1e-12
        %v579 = vmax.f32 %v509, 1e-12
        %v580 = vmax.f32 %v516, 1e-12
        %v581 = vmax.f32 %v523, 1e-12
        %v582 = vmax.f32 %v530, 1e-12
        %v583 = vmax.f32 %v537, 1e-12
        %v584 = vmax.f32 %v544, 1e-12
        %v585 = vmax.f32 %v551, 1e-12
        %v586 = vmax.f32 %v558, 1e-12
        %v587 = vmax.f32 %v565, 1e-12
        %v588 = vmax.f32 %v572, 1e-12
        %v589 = vrcp.pop %v573
        %v590 = vmul.f32 %v397, %v589
        %v591 = vrcp.pop %v574
        %v592 = vmul.f32 %v398, %v591
        %v593 = vrcp.pop %v575
        %v594 = vmul.f32 %v399, %v593
        %v595 = vrcp.pop %v576
        %v596 = vmul.f32 %v400, %v595
        %v597 = vrcp.pop %v577
        %v598 = vmul.f32 %v401, %v597
        %v599 = vrcp.pop %v578
        %v600 = vmul.f32 %v402, %v599
        %v601 = vrcp.pop %v579
        %v602 = vmul.f32 %v403, %v601
        %v603 = vrcp.pop %v580
        %v604 = vmul.f32 %v404, %v603
        %v605 = vrcp.pop %v581
        %v606 = vmul.f32 %v405, %v605
        %v607 = vrcp.pop %v582
        %v608 = vmul.f32 %v406, %v607
        %v609 = vrcp.pop %v583
        %v610 = vmul.f32 %v407, %v609
        %v611 = vrcp.pop %v584
        %v612 = vmul.f32 %v408, %v611
        %v613 = vrcp.pop %v585
        %v614 = vmul.f32 %v409, %v613
        %v615 = vrcp.pop %v586
        %v616 = vmul.f32 %v410, %v615
        %v617 = vrcp.pop %v587
        %v618 = vmul.f32 %v411, %v617
        %v619 = vrcp.pop %v588
        %v620 = vmul.f32 %v412, %v619
        %v621 = vmul.f32 %v590, 11.313708
        %v622 = vmul.f32 %v592, 11.313708
        %v623 = vmul.f32 %v594, 11.313708
        %v624 = vmul.f32 %v596, 11.313708
        %v625 = vmul.f32 %v598, 11.313708
        %v626 = vmul.f32 %v600, 11.313708
        %v627 = vmul.f32 %v602, 11.313708
        %v628 = vmul.f32 %v604, 11.313708
        %v629 = vmul.f32 %v606, 11.313708
        %v630 = vmul.f32 %v608, 11.313708
        %v631 = vmul.f32 %v610, 11.313708
        %v632 = vmul.f32 %v612, 11.313708
        %v633 = vmul.f32 %v614, 11.313708
        %v634 = vmul.f32 %v616, 11.313708
        %v635 = vmul.f32 %v618, 11.313708
        %v636 = vmul.f32 %v620, 11.313708
        %v637 = vld [vmem:[#allocation5] sm:$0x1]
        %v639 = vlaneseq
        %v640 = vshrl.u32 %v639, 7
        %v641 = vsub.s32 0, %v640
        %v642 = vrot.slane %v637, %v641
        %v644 = vmul.f32 %v621, %v642
        %v645 = vmul.f32 %v622, %v642
        %v646 = vmul.f32 %v623, %v642
        %v647 = vmul.f32 %v624, %v642
        %v648 = vmul.f32 %v625, %v642
        %v649 = vmul.f32 %v626, %v642
        %v650 = vmul.f32 %v627, %v642
        %v651 = vmul.f32 %v628, %v642
        %v652 = vmul.f32 %v629, %v642
        %v653 = vmul.f32 %v630, %v642
        %v654 = vmul.f32 %v631, %v642
        %v655 = vmul.f32 %v632, %v642
        %v656 = vmul.f32 %v633, %v642
        %v657 = vmul.f32 %v634, %v642
        %v658 = vmul.f32 %v635, %v642
        %v659 = vmul.f32 %v636, %v642
        %v660 = vld [vmem:[#allocation7] sm:$0xff]
        %v661 = vld [vmem:[#allocation7 + $0x8] sm:$0xff]
        %v662 = vld [vmem:[#allocation7 + $0x10] sm:$0xff]
        %v663 = vld [vmem:[#allocation7 + $0x18] sm:$0xff]
        %v664 = vld [vmem:[#allocation7 + $0x20] sm:$0xff]
        %v665 = vld [vmem:[#allocation7 + $0x28] sm:$0xff]
        %v666 = vld [vmem:[#allocation7 + $0x30] sm:$0xff]
        %v667 = vld [vmem:[#allocation7 + $0x38] sm:$0xff]
        %v668 = vld [vmem:[#allocation7 + $0x40] sm:$0xff]
        %v669 = vld [vmem:[#allocation7 + $0x48] sm:$0xff]
        %v670 = vld [vmem:[#allocation7 + $0x50] sm:$0xff]
        %v671 = vld [vmem:[#allocation7 + $0x58] sm:$0xff]
        %v672 = vld [vmem:[#allocation7 + $0x60] sm:$0xff]
        %v673 = vld [vmem:[#allocation7 + $0x68] sm:$0xff]
        %v674 = vld [vmem:[#allocation7 + $0x70] sm:$0xff]
        %v675 = vld [vmem:[#allocation7 + $0x78] sm:$0xff]
        %676 = vmatprep.subr.mxu0 0.0
        %677 = vmatpush1.msra.mxu0 %v660
        %678 = vmatprep.subr.mxu0 0.0
        %679 = vmatpush1.msra.mxu0 %v661
        %680 = vmatprep.subr.mxu0 0.0
        %681 = vmatpush1.msra.mxu0 %v662
        %682 = vmatprep.subr.mxu0 0.0
        %683 = vmatpush1.msra.mxu0 %v663
        %684 = vmatprep.subr.mxu0 0.0
        %685 = vmatpush1.msra.mxu0 %v664
        %686 = vmatprep.subr.mxu0 0.0
        %687 = vmatpush1.msra.mxu0 %v665
        %688 = vmatprep.subr.mxu0 0.0
        %689 = vmatpush1.msra.mxu0 %v666
        %690 = vmatprep.subr.mxu0 0.0
        %691 = vmatpush1.msra.mxu0 %v667
        %692 = vmatprep.subr.mxu0 0.0
        %693 = vmatpush1.msra.mxu0 %v668
        %694 = vmatprep.subr.mxu0 0.0
        %695 = vmatpush1.msra.mxu0 %v669
        %696 = vmatprep.subr.mxu0 0.0
        %697 = vmatpush1.msra.mxu0 %v670
        %698 = vmatprep.subr.mxu0 0.0
        %699 = vmatpush1.msra.mxu0 %v671
        %700 = vmatprep.subr.mxu0 0.0
        %701 = vmatpush1.msra.mxu0 %v672
        %702 = vmatprep.subr.mxu0 0.0
        %703 = vmatpush1.msra.mxu0 %v673
        %704 = vmatprep.subr.mxu0 0.0
        %705 = vmatpush1.msra.mxu0 %v674
        %706 = vmatprep.subr.mxu0 0.0
        %707 = vmatpush1.msra.mxu0 %v675
        %708 = vmatprep.subr.mxu0 0.0
        %709 = vmatpush1.msra.mxu0 0.0
        %710 = vmatprep.subr.mxu0 0.0
        %711 = vmatpush1.msra.mxu0 0.0
        %712 = vmatprep.subr.mxu0 0.0
        %713 = vmatpush1.msra.mxu0 0.0
        %714 = vmatprep.subr.mxu0 0.0
        %715 = vmatpush1.msra.mxu0 0.0
        %716 = vmatprep.subr.mxu0 0.0
        %717 = vmatpush1.msra.mxu0 0.0
        %718 = vmatprep.subr.mxu0 0.0
        %719 = vmatpush1.msra.mxu0 0.0
        %720 = vmatprep.subr.mxu0 0.0
        %721 = vmatpush1.msra.mxu0 0.0
        %722 = vmatprep.subr.mxu0 0.0
        %723 = vmatpush1.msra.mxu0 0.0
        %724 = vmatprep.subr.mxu0 0.0
        %725 = vmatpush1.msra.mxu0 0.0
        %726 = vmatprep.subr.mxu0 0.0
        %727 = vmatpush1.msra.mxu0 0.0
        %728 = vmatprep.subr.mxu0 0.0
        %729 = vmatpush1.msra.mxu0 0.0
        %730 = vmatprep.subr.mxu0 0.0
        %731 = vmatpush1.msra.mxu0 0.0
        %732 = vmatprep.subr.mxu0 0.0
        %733 = vmatpush1.msra.mxu0 0.0
        %734 = vmatprep.subr.mxu0 0.0
        %735 = vmatpush1.msra.mxu0 0.0
        %736 = vmatprep.subr.mxu0 0.0
        %737 = vmatpush1.msra.mxu0 0.0
        %738 = vmatprep.subr.mxu0 0.0
        %739 = vmatpush1.msra.mxu0 0.0
        %740 = vmatprep.mubr.f32.mxu0 0.0
        %741 = vmatmul.mubr.f32.gmra.mrb[0].mxu0 %v644
        %v742 = vpop.f32.mrb[0].mxu0
        %v743 = vadd.f32 0.0, %v742
        %v744 = vpop.f32.mrb[0].mxu0
        %745 = vmatprep.mubr.f32.mxu0 0.0
        %746 = vmatmul.mubr.f32.gmra.mrb[0].mxu0 %v645
        %v747 = vpop.f32.mrb[0].mxu0
        %v748 = vadd.f32 0.0, %v747
        %v749 = vpop.f32.mrb[0].mxu0
        %750 = vmatprep.mubr.f32.mxu0 0.0
        %751 = vmatmul.mubr.f32.gmra.mrb[0].mxu0 %v646
        %v752 = vpop.f32.mrb[0].mxu0
        %v753 = vadd.f32 0.0, %v752
        %v754 = vpop.f32.mrb[0].mxu0
        %755 = vmatprep.mubr.f32.mxu0 0.0
        %756 = vmatmul.mubr.f32.gmra.mrb[0].mxu0 %v647
        %v757 = vpop.f32.mrb[0].mxu0
        %v758 = vadd.f32 0.0, %v757
        %v759 = vpop.f32.mrb[0].mxu0
        %760 = vmatprep.mubr.f32.mxu0 0.0
        %761 = vmatmul.mubr.f32.gmra.mrb[0].mxu0 %v648
        %v762 = vpop.f32.mrb[0].mxu0
        %v763 = vadd.f32 0.0, %v762
        %v764 = vpop.f32.mrb[0].mxu0
        %765 = vmatprep.mubr.f32.mxu0 0.0
        %766 = vmatmul.mubr.f32.gmra.mrb[0].mxu0 %v649
        %v767 = vpop.f32.mrb[0].mxu0
        %v768 = vadd.f32 0.0, %v767
        %v769 = vpop.f32.mrb[0].mxu0
        %770 = vmatprep.mubr.f32.mxu0 0.0
        %771 = vmatmul.mubr.f32.gmra.mrb[0].mxu0 %v650
        %v772 = vpop.f32.mrb[0].mxu0
        %v773 = vadd.f32 0.0, %v772
        %v774 = vpop.f32.mrb[0].mxu0
        %775 = vmatprep.mubr.f32.mxu0 0.0
        %776 = vmatmul.mubr.f32.gmra.mrb[0].mxu0 %v651
        %v777 = vpop.f32.mrb[0].mxu0
        %v778 = vadd.f32 0.0, %v777
        %v779 = vpop.f32.mrb[0].mxu0
        %780 = vmatprep.mubr.f32.mxu0 0.0
        %781 = vmatmul.mubr.f32.gmra.mrb[0].mxu0 %v652
        %v782 = vpop.f32.mrb[0].mxu0
        %v783 = vadd.f32 0.0, %v782
        %v784 = vpop.f32.mrb[0].mxu0
        %785 = vmatprep.mubr.f32.mxu0 0.0
        %786 = vmatmul.mubr.f32.gmra.mrb[0].mxu0 %v653
        %v787 = vpop.f32.mrb[0].mxu0
        %v788 = vadd.f32 0.0, %v787
        %v789 = vpop.f32.mrb[0].mxu0
        %790 = vmatprep.mubr.f32.mxu0 0.0
        %791 = vmatmul.mubr.f32.gmra.mrb[0].mxu0 %v654
        %v792 = vpop.f32.mrb[0].mxu0
        %v793 = vadd.f32 0.0, %v792
        %v794 = vpop.f32.mrb[0].mxu0
        %795 = vmatprep.mubr.f32.mxu0 0.0
        %796 = vmatmul.mubr.f32.gmra.mrb[0].mxu0 %v655
        %v797 = vpop.f32.mrb[0].mxu0
        %v798 = vadd.f32 0.0, %v797
        %v799 = vpop.f32.mrb[0].mxu0
        %800 = vmatprep.mubr.f32.mxu0 0.0
        %801 = vmatmul.mubr.f32.gmra.mrb[0].mxu0 %v656
        %v802 = vpop.f32.mrb[0].mxu0
        %v803 = vadd.f32 0.0, %v802
        %v804 = vpop.f32.mrb[0].mxu0
        %805 = vmatprep.mubr.f32.mxu0 0.0
        %806 = vmatmul.mubr.f32.gmra.mrb[0].mxu0 %v657
        %v807 = vpop.f32.mrb[0].mxu0
        %v808 = vadd.f32 0.0, %v807
        %v809 = vpop.f32.mrb[0].mxu0
        %810 = vmatprep.mubr.f32.mxu0 0.0
        %811 = vmatmul.mubr.f32.gmra.mrb[0].mxu0 %v658
        %v812 = vpop.f32.mrb[0].mxu0
        %v813 = vadd.f32 0.0, %v812
        %v814 = vpop.f32.mrb[0].mxu0
        %815 = vmatprep.mubr.f32.mxu0 0.0
        %816 = vmatmul.mubr.f32.gmra.mrb[0].mxu0 %v659
        %v817 = vpop.f32.mrb[0].mxu0
        %v818 = vadd.f32 0.0, %v817
        %v819 = vpop.f32.mrb[0].mxu0
        %820 = vdwg.mxu0
        %821 = vst [vmem:[%s378] sm:$0xff] %v743
        %822 = vst [vmem:[%s378 + $0x8] sm:$0xff] %v748
        %823 = vst [vmem:[%s378 + $0x10] sm:$0xff] %v753
        %824 = vst [vmem:[%s378 + $0x18] sm:$0xff] %v758
        %825 = vst [vmem:[%s378 + $0x20] sm:$0xff] %v763
        %826 = vst [vmem:[%s378 + $0x28] sm:$0xff] %v768
        %827 = vst [vmem:[%s378 + $0x30] sm:$0xff] %v773
        %828 = vst [vmem:[%s378 + $0x38] sm:$0xff] %v778
        %829 = vst [vmem:[%s378 + $0x40] sm:$0xff] %v783
        %830 = vst [vmem:[%s378 + $0x48] sm:$0xff] %v788
        %831 = vst [vmem:[%s378 + $0x50] sm:$0xff] %v793
        %832 = vst [vmem:[%s378 + $0x58] sm:$0xff] %v798
        %833 = vst [vmem:[%s378 + $0x60] sm:$0xff] %v803
        %834 = vst [vmem:[%s378 + $0x68] sm:$0xff] %v808
        %835 = vst [vmem:[%s378 + $0x70] sm:$0xff] %v813
        %836 = vst [vmem:[%s378 + $0x78] sm:$0xff] %v818
        %v837 = vld [vmem:[#allocation8] sm:$0xff]
        %v838 = vld [vmem:[#allocation8 + $0x8] sm:$0xff]
        %v839 = vld [vmem:[#allocation8 + $0x10] sm:$0xff]
        %v840 = vld [vmem:[#allocation8 + $0x18] sm:$0xff]
        %v841 = vld [vmem:[#allocation8 + $0x20] sm:$0xff]
        %v842 = vld [vmem:[#allocation8 + $0x28] sm:$0xff]
        %v843 = vld [vmem:[#allocation8 + $0x30] sm:$0xff]
        %v844 = vld [vmem:[#allocation8 + $0x38] sm:$0xff]
        %v845 = vld [vmem:[#allocation8 + $0x40] sm:$0xff]
        %v846 = vld [vmem:[#allocation8 + $0x48] sm:$0xff]
        %v847 = vld [vmem:[#allocation8 + $0x50] sm:$0xff]
        %v848 = vld [vmem:[#allocation8 + $0x58] sm:$0xff]
        %v849 = vld [vmem:[#allocation8 + $0x60] sm:$0xff]
        %v850 = vld [vmem:[#allocation8 + $0x68] sm:$0xff]
        %v851 = vld [vmem:[#allocation8 + $0x70] sm:$0xff]
        %v852 = vld [vmem:[#allocation8 + $0x78] sm:$0xff]
        %853 = vmatprep.subr.mxu0 0.0
        %854 = vmatpush1.msra.mxu0 %v837
        %855 = vmatprep.subr.mxu0 0.0
        %856 = vmatpush1.msra.mxu0 %v838
        %857 = vmatprep.subr.mxu0 0.0
        %858 = vmatpush1.msra.mxu0 %v839
        %859 = vmatprep.subr.mxu0 0.0
        %860 = vmatpush1.msra.mxu0 %v840
        %861 = vmatprep.subr.mxu0 0.0
        %862 = vmatpush1.msra.mxu0 %v841
        %863 = vmatprep.subr.mxu0 0.0
        %864 = vmatpush1.msra.mxu0 %v842
        %865 = vmatprep.subr.mxu0 0.0
        %866 = vmatpush1.msra.mxu0 %v843
        %867 = vmatprep.subr.mxu0 0.0
        %868 = vmatpush1.msra.mxu0 %v844
        %869 = vmatprep.subr.mxu0 0.0
        %870 = vmatpush1.msra.mxu0 %v845
        %871 = vmatprep.subr.mxu0 0.0
        %872 = vmatpush1.msra.mxu0 %v846
        %873 = vmatprep.subr.mxu0 0.0
        %874 = vmatpush1.msra.mxu0 %v847
        %875 = vmatprep.subr.mxu0 0.0
        %876 = vmatpush1.msra.mxu0 %v848
        %877 = vmatprep.subr.mxu0 0.0
        %878 = vmatpush1.msra.mxu0 %v849
        %879 = vmatprep.subr.mxu0 0.0
        %880 = vmatpush1.msra.mxu0 %v850
        %881 = vmatprep.subr.mxu0 0.0
        %882 = vmatpush1.msra.mxu0 %v851
        %883 = vmatprep.subr.mxu0 0.0
        %884 = vmatpush1.msra.mxu0 %v852
        %885 = vmatprep.subr.mxu0 0.0
        %886 = vmatpush1.msra.mxu0 0.0
        %887 = vmatprep.subr.mxu0 0.0
        %888 = vmatpush1.msra.mxu0 0.0
        %889 = vmatprep.subr.mxu0 0.0
        %890 = vmatpush1.msra.mxu0 0.0
        %891 = vmatprep.subr.mxu0 0.0
        %892 = vmatpush1.msra.mxu0 0.0
        %893 = vmatprep.subr.mxu0 0.0
        %894 = vmatpush1.msra.mxu0 0.0
        %895 = vmatprep.subr.mxu0 0.0
        %896 = vmatpush1.msra.mxu0 0.0
        %897 = vmatprep.subr.mxu0 0.0
        %898 = vmatpush1.msra.mxu0 0.0
        %899 = vmatprep.subr.mxu0 0.0
        %900 = vmatpush1.msra.mxu0 0.0
        %901 = vmatprep.subr.mxu0 0.0
        %902 = vmatpush1.msra.mxu0 0.0
        %903 = vmatprep.subr.mxu0 0.0
        %904 = vmatpush1.msra.mxu0 0.0
        %905 = vmatprep.subr.mxu0 0.0
        %906 = vmatpush1.msra.mxu0 0.0
        %907 = vmatprep.subr.mxu0 0.0
        %908 = vmatpush1.msra.mxu0 0.0
        %909 = vmatprep.subr.mxu0 0.0
        %910 = vmatpush1.msra.mxu0 0.0
        %911 = vmatprep.subr.mxu0 0.0
        %912 = vmatpush1.msra.mxu0 0.0
        %913 = vmatprep.subr.mxu0 0.0
        %914 = vmatpush1.msra.mxu0 0.0
        %915 = vmatprep.subr.mxu0 0.0
        %916 = vmatpush1.msra.mxu0 0.0
        %917 = vmatprep.mubr.f32.mxu0 0.0
        %918 = vmatmul.mubr.f32.gmra.mrb[0].mxu0 %v644
        %v919 = vpop.f32.mrb[0].mxu0
        %v920 = vadd.f32 0.0, %v919
        %v921 = vpop.f32.mrb[0].mxu0
        %922 = vmatprep.mubr.f32.mxu0 0.0
        %923 = vmatmul.mubr.f32.gmra.mrb[0].mxu0 %v645
        %v924 = vpop.f32.mrb[0].mxu0
        %v925 = vadd.f32 0.0, %v924
        %v926 = vpop.f32.mrb[0].mxu0
        %927 = vmatprep.mubr.f32.mxu0 0.0
        %928 = vmatmul.mubr.f32.gmra.mrb[0].mxu0 %v646
        %v929 = vpop.f32.mrb[0].mxu0
        %v930 = vadd.f32 0.0, %v929
        %v931 = vpop.f32.mrb[0].mxu0
        %932 = vmatprep.mubr.f32.mxu0 0.0
        %933 = vmatmul.mubr.f32.gmra.mrb[0].mxu0 %v647
        %v934 = vpop.f32.mrb[0].mxu0
        %v935 = vadd.f32 0.0, %v934
        %v936 = vpop.f32.mrb[0].mxu0
        %937 = vmatprep.mubr.f32.mxu0 0.0
        %938 = vmatmul.mubr.f32.gmra.mrb[0].mxu0 %v648
        %v939 = vpop.f32.mrb[0].mxu0
        %v940 = vadd.f32 0.0, %v939
        %v941 = vpop.f32.mrb[0].mxu0
        %942 = vmatprep.mubr.f32.mxu0 0.0
        %943 = vmatmul.mubr.f32.gmra.mrb[0].mxu0 %v649
        %v944 = vpop.f32.mrb[0].mxu0
        %v945 = vadd.f32 0.0, %v944
        %v946 = vpop.f32.mrb[0].mxu0
        %947 = vmatprep.mubr.f32.mxu0 0.0
        %948 = vmatmul.mubr.f32.gmra.mrb[0].mxu0 %v650
        %v949 = vpop.f32.mrb[0].mxu0
        %v950 = vadd.f32 0.0, %v949
        %v951 = vpop.f32.mrb[0].mxu0
        %952 = vmatprep.mubr.f32.mxu0 0.0
        %953 = vmatmul.mubr.f32.gmra.mrb[0].mxu0 %v651
        %v954 = vpop.f32.mrb[0].mxu0
        %v955 = vadd.f32 0.0, %v954
        %v956 = vpop.f32.mrb[0].mxu0
        %957 = vmatprep.mubr.f32.mxu0 0.0
        %958 = vmatmul.mubr.f32.gmra.mrb[0].mxu0 %v652
        %v959 = vpop.f32.mrb[0].mxu0
        %v960 = vadd.f32 0.0, %v959
        %v961 = vpop.f32.mrb[0].mxu0
        %962 = vmatprep.mubr.f32.mxu0 0.0
        %963 = vmatmul.mubr.f32.gmra.mrb[0].mxu0 %v653
        %v964 = vpop.f32.mrb[0].mxu0
        %v965 = vadd.f32 0.0, %v964
        %v966 = vpop.f32.mrb[0].mxu0
        %967 = vmatprep.mubr.f32.mxu0 0.0
        %968 = vmatmul.mubr.f32.gmra.mrb[0].mxu0 %v654
        %v969 = vpop.f32.mrb[0].mxu0
        %v970 = vadd.f32 0.0, %v969
        %v971 = vpop.f32.mrb[0].mxu0
        %972 = vmatprep.mubr.f32.mxu0 0.0
        %973 = vmatmul.mubr.f32.gmra.mrb[0].mxu0 %v655
        %v974 = vpop.f32.mrb[0].mxu0
        %v975 = vadd.f32 0.0, %v974
        %v976 = vpop.f32.mrb[0].mxu0
        %977 = vmatprep.mubr.f32.mxu0 0.0
        %978 = vmatmul.mubr.f32.gmra.mrb[0].mxu0 %v656
        %v979 = vpop.f32.mrb[0].mxu0
        %v980 = vadd.f32 0.0, %v979
        %v981 = vpop.f32.mrb[0].mxu0
        %982 = vmatprep.mubr.f32.mxu0 0.0
        %983 = vmatmul.mubr.f32.gmra.mrb[0].mxu0 %v657
        %v984 = vpop.f32.mrb[0].mxu0
        %v985 = vadd.f32 0.0, %v984
        %v986 = vpop.f32.mrb[0].mxu0
        %987 = vmatprep.mubr.f32.mxu0 0.0
        %988 = vmatmul.mubr.f32.gmra.mrb[0].mxu0 %v658
        %v989 = vpop.f32.mrb[0].mxu0
        %v990 = vadd.f32 0.0, %v989
        %v991 = vpop.f32.mrb[0].mxu0
        %992 = vmatprep.mubr.f32.mxu0 0.0
        %993 = vmatmul.mubr.f32.gmra.mrb[0].mxu0 %v659
        %v994 = vpop.f32.mrb[0].mxu0
        %v995 = vadd.f32 0.0, %v994
        %v996 = vpop.f32.mrb[0].mxu0
        %997 = vdwg.mxu0
        %998 = vst [vmem:[%s385] sm:$0xff] %v920
        %999 = vst [vmem:[%s385 + $0x8] sm:$0xff] %v925
        %1000 = vst [vmem:[%s385 + $0x10] sm:$0xff] %v930
        %1001 = vst [vmem:[%s385 + $0x18] sm:$0xff] %v935
        %1002 = vst [vmem:[%s385 + $0x20] sm:$0xff] %v940
        %1003 = vst [vmem:[%s385 + $0x28] sm:$0xff] %v945
        %1004 = vst [vmem:[%s385 + $0x30] sm:$0xff] %v950
        %1005 = vst [vmem:[%s385 + $0x38] sm:$0xff] %v955
        %1006 = vst [vmem:[%s385 + $0x40] sm:$0xff] %v960
        %1007 = vst [vmem:[%s385 + $0x48] sm:$0xff] %v965
        %1008 = vst [vmem:[%s385 + $0x50] sm:$0xff] %v970
        %1009 = vst [vmem:[%s385 + $0x58] sm:$0xff] %v975
        %1010 = vst [vmem:[%s385 + $0x60] sm:$0xff] %v980
        %1011 = vst [vmem:[%s385 + $0x68] sm:$0xff] %v985
        %1012 = vst [vmem:[%s385 + $0x70] sm:$0xff] %v990
        %1013 = vst [vmem:[%s385 + $0x78] sm:$0xff] %v995
        %v1014 = vld [vmem:[#allocation10] sm:$0xff]
        %v1015 = vld [vmem:[#allocation10 + $0x8] sm:$0xff]
        %v1016 = vld [vmem:[#allocation10 + $0x10] sm:$0xff]
        %v1017 = vld [vmem:[#allocation10 + $0x18] sm:$0xff]
        %v1018 = vld [vmem:[#allocation10 + $0x20] sm:$0xff]
        %v1019 = vld [vmem:[#allocation10 + $0x28] sm:$0xff]
        %v1020 = vld [vmem:[#allocation10 + $0x30] sm:$0xff]
        %v1021 = vld [vmem:[#allocation10 + $0x38] sm:$0xff]
        %v1022 = vld [vmem:[#allocation10 + $0x40] sm:$0xff]
        %v1023 = vld [vmem:[#allocation10 + $0x48] sm:$0xff]
        %v1024 = vld [vmem:[#allocation10 + $0x50] sm:$0xff]
        %v1025 = vld [vmem:[#allocation10 + $0x58] sm:$0xff]
        %v1026 = vld [vmem:[#allocation10 + $0x60] sm:$0xff]
        %v1027 = vld [vmem:[#allocation10 + $0x68] sm:$0xff]
        %v1028 = vld [vmem:[#allocation10 + $0x70] sm:$0xff]
        %v1029 = vld [vmem:[#allocation10 + $0x78] sm:$0xff]
        %1030 = vmatprep.subr.mxu0 0.0
        %1031 = vmatpush1.msra.mxu0 %v1014
        %1032 = vmatprep.subr.mxu0 0.0
        %1033 = vmatpush1.msra.mxu0 %v1015
        %1034 = vmatprep.subr.mxu0 0.0
        %1035 = vmatpush1.msra.mxu0 %v1016
        %1036 = vmatprep.subr.mxu0 0.0
        %1037 = vmatpush1.msra.mxu0 %v1017
        %1038 = vmatprep.subr.mxu0 0.0
        %1039 = vmatpush1.msra.mxu0 %v1018
        %1040 = vmatprep.subr.mxu0 0.0
        %1041 = vmatpush1.msra.mxu0 %v1019
        %1042 = vmatprep.subr.mxu0 0.0
        %1043 = vmatpush1.msra.mxu0 %v1020
        %1044 = vmatprep.subr.mxu0 0.0
        %1045 = vmatpush1.msra.mxu0 %v1021
        %1046 = vmatprep.subr.mxu0 0.0
        %1047 = vmatpush1.msra.mxu0 %v1022
        %1048 = vmatprep.subr.mxu0 0.0
        %1049 = vmatpush1.msra.mxu0 %v1023
        %1050 = vmatprep.subr.mxu0 0.0
        %1051 = vmatpush1.msra.mxu0 %v1024
        %1052 = vmatprep.subr.mxu0 0.0
        %1053 = vmatpush1.msra.mxu0 %v1025
        %1054 = vmatprep.subr.mxu0 0.0
        %1055 = vmatpush1.msra.mxu0 %v1026
        %1056 = vmatprep.subr.mxu0 0.0
        %1057 = vmatpush1.msra.mxu0 %v1027
        %1058 = vmatprep.subr.mxu0 0.0
        %1059 = vmatpush1.msra.mxu0 %v1028
        %1060 = vmatprep.subr.mxu0 0.0
        %1061 = vmatpush1.msra.mxu0 %v1029
        %1062 = vmatprep.subr.mxu0 0.0
        %1063 = vmatpush1.msra.mxu0 0.0
        %1064 = vmatprep.subr.mxu0 0.0
        %1065 = vmatpush1.msra.mxu0 0.0
        %1066 = vmatprep.subr.mxu0 0.0
        %1067 = vmatpush1.msra.mxu0 0.0
        %1068 = vmatprep.subr.mxu0 0.0
        %1069 = vmatpush1.msra.mxu0 0.0
        %1070 = vmatprep.subr.mxu0 0.0
        %1071 = vmatpush1.msra.mxu0 0.0
        %1072 = vmatprep.subr.mxu0 0.0
        %1073 = vmatpush1.msra.mxu0 0.0
        %1074 = vmatprep.subr.mxu0 0.0
        %1075 = vmatpush1.msra.mxu0 0.0
        %1076 = vmatprep.subr.mxu0 0.0
        %1077 = vmatpush1.msra.mxu0 0.0
        %1078 = vmatprep.subr.mxu0 0.0
        %1079 = vmatpush1.msra.mxu0 0.0
        %1080 = vmatprep.subr.mxu0 0.0
        %1081 = vmatpush1.msra.mxu0 0.0
        %1082 = vmatprep.subr.mxu0 0.0
        %1083 = vmatpush1.msra.mxu0 0.0
        %1084 = vmatprep.subr.mxu0 0.0
        %1085 = vmatpush1.msra.mxu0 0.0
        %1086 = vmatprep.subr.mxu0 0.0
        %1087 = vmatpush1.msra.mxu0 0.0
        %1088 = vmatprep.subr.mxu0 0.0
        %1089 = vmatpush1.msra.mxu0 0.0
        %1090 = vmatprep.subr.mxu0 0.0
        %1091 = vmatpush1.msra.mxu0 0.0
        %1092 = vmatprep.subr.mxu0 0.0
        %1093 = vmatpush1.msra.mxu0 0.0
        %1094 = vmatprep.mubr.f32.mxu0 0.0
        %1095 = vmatmul.mubr.f32.gmra.mrb[0].mxu0 %v644
        %v1096 = vpop.f32.mrb[0].mxu0
        %v1097 = vadd.f32 0.0, %v1096
        %v1098 = vpop.f32.mrb[0].mxu0
        %1099 = vmatprep.mubr.f32.mxu0 0.0
        %1100 = vmatmul.mubr.f32.gmra.mrb[0].mxu0 %v645
        %v1101 = vpop.f32.mrb[0].mxu0
        %v1102 = vadd.f32 0.0, %v1101
        %v1103 = vpop.f32.mrb[0].mxu0
        %1104 = vmatprep.mubr.f32.mxu0 0.0
        %1105 = vmatmul.mubr.f32.gmra.mrb[0].mxu0 %v646
        %v1106 = vpop.f32.mrb[0].mxu0
        %v1107 = vadd.f32 0.0, %v1106
        %v1108 = vpop.f32.mrb[0].mxu0
        %1109 = vmatprep.mubr.f32.mxu0 0.0
        %1110 = vmatmul.mubr.f32.gmra.mrb[0].mxu0 %v647
        %v1111 = vpop.f32.mrb[0].mxu0
        %v1112 = vadd.f32 0.0, %v1111
        %v1113 = vpop.f32.mrb[0].mxu0
        %1114 = vmatprep.mubr.f32.mxu0 0.0
        %1115 = vmatmul.mubr.f32.gmra.mrb[0].mxu0 %v648
        %v1116 = vpop.f32.mrb[0].mxu0
        %v1117 = vadd.f32 0.0, %v1116
        %v1118 = vpop.f32.mrb[0].mxu0
        %1119 = vmatprep.mubr.f32.mxu0 0.0
        %1120 = vmatmul.mubr.f32.gmra.mrb[0].mxu0 %v649
        %v1121 = vpop.f32.mrb[0].mxu0
        %v1122 = vadd.f32 0.0, %v1121
        %v1123 = vpop.f32.mrb[0].mxu0
        %1124 = vmatprep.mubr.f32.mxu0 0.0
        %1125 = vmatmul.mubr.f32.gmra.mrb[0].mxu0 %v650
        %v1126 = vpop.f32.mrb[0].mxu0
        %v1127 = vadd.f32 0.0, %v1126
        %v1128 = vpop.f32.mrb[0].mxu0
        %1129 = vmatprep.mubr.f32.mxu0 0.0
        %1130 = vmatmul.mubr.f32.gmra.mrb[0].mxu0 %v651
        %v1131 = vpop.f32.mrb[0].mxu0
        %v1132 = vadd.f32 0.0, %v1131
        %v1133 = vpop.f32.mrb[0].mxu0
        %1134 = vmatprep.mubr.f32.mxu0 0.0
        %1135 = vmatmul.mubr.f32.gmra.mrb[0].mxu0 %v652
        %v1136 = vpop.f32.mrb[0].mxu0
        %v1137 = vadd.f32 0.0, %v1136
        %v1138 = vpop.f32.mrb[0].mxu0
        %1139 = vmatprep.mubr.f32.mxu0 0.0
        %1140 = vmatmul.mubr.f32.gmra.mrb[0].mxu0 %v653
        %v1141 = vpop.f32.mrb[0].mxu0
        %v1142 = vadd.f32 0.0, %v1141
        %v1143 = vpop.f32.mrb[0].mxu0
        %1144 = vmatprep.mubr.f32.mxu0 0.0
        %1145 = vmatmul.mubr.f32.gmra.mrb[0].mxu0 %v654
        %v1146 = vpop.f32.mrb[0].mxu0
        %v1147 = vadd.f32 0.0, %v1146
        %v1148 = vpop.f32.mrb[0].mxu0
        %1149 = vmatprep.mubr.f32.mxu0 0.0
        %1150 = vmatmul.mubr.f32.gmra.mrb[0].mxu0 %v655
        %v1151 = vpop.f32.mrb[0].mxu0
        %v1152 = vadd.f32 0.0, %v1151
        %v1153 = vpop.f32.mrb[0].mxu0
        %1154 = vmatprep.mubr.f32.mxu0 0.0
        %1155 = vmatmul.mubr.f32.gmra.mrb[0].mxu0 %v656
        %v1156 = vpop.f32.mrb[0].mxu0
        %v1157 = vadd.f32 0.0, %v1156
        %v1158 = vpop.f32.mrb[0].mxu0
        %1159 = vmatprep.mubr.f32.mxu0 0.0
        %1160 = vmatmul.mubr.f32.gmra.mrb[0].mxu0 %v657
        %v1161 = vpop.f32.mrb[0].mxu0
        %v1162 = vadd.f32 0.0, %v1161
        %v1163 = vpop.f32.mrb[0].mxu0
        %1164 = vmatprep.mubr.f32.mxu0 0.0
        %1165 = vmatmul.mubr.f32.gmra.mrb[0].mxu0 %v658
        %v1166 = vpop.f32.mrb[0].mxu0
        %v1167 = vadd.f32 0.0, %v1166
        %v1168 = vpop.f32.mrb[0].mxu0
        %1169 = vmatprep.mubr.f32.mxu0 0.0
        %1170 = vmatmul.mubr.f32.gmra.mrb[0].mxu0 %v659
        %v1171 = vpop.f32.mrb[0].mxu0
        %v1172 = vadd.f32 0.0, %v1171
        %v1173 = vpop.f32.mrb[0].mxu0
        %1174 = vdwg.mxu0
        %1175 = vst [vmem:[%s392] sm:$0xff] %v1097
        %1176 = vst [vmem:[%s392 + $0x8] sm:$0xff] %v1102
        %1177 = vst [vmem:[%s392 + $0x10] sm:$0xff] %v1107
        %1178 = vst [vmem:[%s392 + $0x18] sm:$0xff] %v1112
        %1179 = vst [vmem:[%s392 + $0x20] sm:$0xff] %v1117
        %1180 = vst [vmem:[%s392 + $0x28] sm:$0xff] %v1122
        %1181 = vst [vmem:[%s392 + $0x30] sm:$0xff] %v1127
        %1182 = vst [vmem:[%s392 + $0x38] sm:$0xff] %v1132
        %1183 = vst [vmem:[%s392 + $0x40] sm:$0xff] %v1137
        %1184 = vst [vmem:[%s392 + $0x48] sm:$0xff] %v1142
        %1185 = vst [vmem:[%s392 + $0x50] sm:$0xff] %v1147
        %1186 = vst [vmem:[%s392 + $0x58] sm:$0xff] %v1152
        %1187 = vst [vmem:[%s392 + $0x60] sm:$0xff] %v1157
        %1188 = vst [vmem:[%s392 + $0x68] sm:$0xff] %v1162
        %1189 = vst [vmem:[%s392 + $0x70] sm:$0xff] %v1167
        %1190 = vst [vmem:[%s392 + $0x78] sm:$0xff] %v1172
        %s1191 = sand.u32 %s164, 1
        %s1192 = scalar_lea.sflag [#allocation4], %s1191
        %s1193 = sand.u32 %s164, 1
        %s1194 = smul.addr %s1193, 128
        %s1195 = scalar_lea.vmem [#allocation11], %s1194
        %s1196 = sand.u32 %s30, 1
        %s1197 = scalar_lea.sflag [#allocation13], %s1196
        %s1198 = sand.u32 %s192, 1
        %s1199 = smul.addr %s1198, 128
        %s1200 = scalar_lea.vmem [#allocation12], %s1199
        %s1201 = sand.u32 %s30, 1
        %s1202 = scalar_lea.sflag [#allocation13], %s1201
        %s1203 = sand.u32 %s220, 1
        %s1204 = smul.addr %s1203, 128
        %s1205 = scalar_lea.vmem [#allocation14], %s1204
        // Predicated region
        $region61: #{tpu_custom_call.1} parent=39 // pred_check
          %p1206 = pneg %p174
        $region62: #{tpu_custom_call.1} parent=39 // pred_check_branch
          %1208 = sbr.rel (%p1206) target = $region64
        $region63: #{tpu_custom_call.1} parent=39 // pred_region
          %s1209 = smul.u32 16, %s35
          %s1211 = ssub.s32 2048, 2048
          %1212 = vsyncadd %s1192, %s1211
          %s1213 = smul.addr %s34, 32
          %s1214 = sadd.s32 %s1209, %s1213
          %s1215 = smul.addr %s1214, 128
          %s1216 = scalar_lea.hbm %s5, %s1215
          %s1217 = sshll.u32 %s1195, 4
          %s1218 = int_to_ptr.vmem [resolvable:$true] %s1217
          %1223 = dma.vmem_to_hbm [thread:$0]  %s1218, 2048, %s1216, %s1192, 128, 128, 8
        $region64: #{tpu_custom_call.1} parent=39 // pred_fallthru
          _
        // Predicated region
        $region65: #{tpu_custom_call.1} parent=39 // pred_check
          %p1224 = pneg %p202
        $region66: #{tpu_custom_call.1} parent=39 // pred_check_branch
          %1226 = sbr.rel (%p1224) target = $region68
        $region67: #{tpu_custom_call.1} parent=39 // pred_region
          %s1227 = smul.u32 16, %s35
          %s1229 = ssub.s32 2048, 2048
          %1230 = vsyncadd %s1197, %s1229
          %s1231 = smul.addr %s34, 32
          %s1232 = sadd.s32 %s1227, %s1231
          %s1233 = smul.addr %s1232, 128
          %s1234 = scalar_lea.hbm %s6, %s1233
          %s1235 = sshll.u32 %s1200, 4
          %s1236 = int_to_ptr.vmem [resolvable:$true] %s1235
          %1241 = dma.vmem_to_hbm [thread:$0]  %s1236, 2048, %s1234, %s1197, 128, 128, 8
        $region68: #{tpu_custom_call.1} parent=39 // pred_fallthru
          _
        // Predicated region
        $region69: #{tpu_custom_call.1} parent=39 // pred_check
          %p1242 = pneg %p230
        $region70: #{tpu_custom_call.1} parent=39 // pred_check_branch
          %1244 = sbr.rel (%p1242) target = $region72
        $region71: #{tpu_custom_call.1} parent=39 // pred_region
          %s1245 = smul.u32 16, %s35
          %s1247 = ssub.s32 2048, 2048
          %1248 = vsyncadd %s1202, %s1247
          %s1249 = smul.addr %s34, 32
          %s1250 = sadd.s32 %s1245, %s1249
          %s1251 = smul.addr %s1250, 128
          %s1252 = scalar_lea.hbm %s7, %s1251
          %s1253 = sshll.u32 %s1205, 4
          %s1254 = int_to_ptr.vmem [resolvable:$true] %s1253
          %1259 = dma.vmem_to_hbm [thread:$0]  %s1254, 2048, %s1252, %s1202, 128, 128, 8
        $region72: #{tpu_custom_call.1} parent=39 // pred_fallthru
          _
      $region40: #{tpu_custom_call.1} parent=5 // pred_fallthru
        _
      %p1260 = scmp.le.s32.totalorder 2, %s25
      // Predicated region
      $region73: #{tpu_custom_call.1} parent=5 // pred_check
        %p1261 = pneg %p1260
      $region74: #{tpu_custom_call.1} parent=5 // pred_check_branch
        %1263 = sbr.rel (%p1261) target = $region76
      $region75: #{tpu_custom_call.1} parent=5 // pred_region
        %s1264 = ssub.s32 %s25, 2
        // Predicated region
        $region77: #{tpu_custom_call.1} parent=75 // pred_check
          %p1265 = pneg %p180
        $region78: #{tpu_custom_call.1} parent=75 // pred_check_branch
          %1267 = sbr.rel (%p1265) target = $region80
        $region79: #{tpu_custom_call.1} parent=75 // pred_region
          %s1268 = sand.u32 %s165, 1
          %s1269 = scalar_lea.sflag [#allocation4], %s1268
          %s1270 = sand.u32 %s165, 1
          %s1271 = smul.addr %s1270, 128
          %s1272 = scalar_lea.vmem [#allocation11], %s1271
          %1273 = dma.done %s1269, 2048
        $region80: #{tpu_custom_call.1} parent=75 // pred_fallthru
          _
        // Predicated region
        $region81: #{tpu_custom_call.1} parent=75 // pred_check
          %p1274 = pneg %p208
        $region82: #{tpu_custom_call.1} parent=75 // pred_check_branch
          %1276 = sbr.rel (%p1274) target = $region84
        $region83: #{tpu_custom_call.1} parent=75 // pred_region
          %s1277 = sand.u32 %s31, 1
          %s1278 = scalar_lea.sflag [#allocation13], %s1277
          %s1279 = sand.u32 %s193, 1
          %s1280 = smul.addr %s1279, 128
          %s1281 = scalar_lea.vmem [#allocation12], %s1280
          %1282 = dma.done %s1278, 2048
        $region84: #{tpu_custom_call.1} parent=75 // pred_fallthru
          _
        // Predicated region
        $region85: #{tpu_custom_call.1} parent=75 // pred_check
          %p1283 = pneg %p236
        $region86: #{tpu_custom_call.1} parent=75 // pred_check_branch
          %1285 = sbr.rel (%p1283) target = $region88
        $region87: #{tpu_custom_call.1} parent=75 // pred_region
          %s1286 = sand.u32 %s31, 1
          %s1287 = scalar_lea.sflag [#allocation13], %s1286
          %s1288 = sand.u32 %s221, 1
          %s1289 = smul.addr %s1288, 128
          %s1290 = scalar_lea.vmem [#allocation14], %s1289
          %1291 = dma.done %s1287, 2048
        $region88: #{tpu_custom_call.1} parent=75 // pred_fallthru
          _
      $region76: #{tpu_custom_call.1} parent=5 // pred_fallthru
        _
    $region6: #{tpu_custom_call.1} parent=1 // loop_footer
      %s29 = sadd.s32 1, %s25
    $region7: #{tpu_custom_call.1} parent=1 // loop_footer_branch
      %24 = sbr.rel target = $region3
    $region8: #{tpu_custom_call.1} parent=1 // loop_exit
      _
    %1292 = vsyncpa [#allocation3], 1
    %s1293 = scalar_lea.sflag [#allocation3], 1
    %1294 = vsyncpa %s1293, 1
    %1295 = vsyncpa [#allocation6], 1
    %1296 = vsyncpa [#allocation9], 1
    %1297 = vsyncpa [#allocation4], 1
    %s1298 = scalar_lea.sflag [#allocation4], 1
    %1299 = vsyncpa %s1298, 1
    %1300 = vsyncpa [#allocation13], 1
    %s1301 = scalar_lea.sflag [#allocation13], 1
    %1302 = vsyncpa %s1301, 1

</llo_original>
